<compile_context>
chip_gen: v7x
topology: tpu7x:2x2x1
jax: 0.10.0
libtpu: 0.0.40
codegen_flags: <defaults>
</compile_context>

<pallas_src>
import jax
import jax.numpy as jnp
from jax.experimental import pallas as pl
from jax.experimental.pallas import tpu as pltpu

NEG_SLOPE = 0.01                      # torch.nn.LeakyReLU default slope
_VMEM_LIMIT = 48 * 1024 * 1024        # explicit scoped-VMEM budget (safe on v5e/v6e/v7x)


def _pick_tile(n, candidates=(512, 256, 128)):
    """Largest canonical tile that evenly divides n; fall back to whole dim."""
    for t in candidates:
        if t <= n and n % t == 0:
            return t
    return n


# --------------------------- Pallas kernels ---------------------------------

def _fused_group_assign_kernel(a_ref, emb_ref, ego_ref, wfc_ref, bfc_ref,
                               wg_ref, bg_ref, onehot_ref, acc_ref):
    """Fused: side = A@E (K-accumulated); then FC+LeakyReLU, group scores, one-hot."""
    k = pl.program_id(1)

    @pl.when(k == 0)
    def _():
        acc_ref[...] = jnp.zeros_like(acc_ref)

    # A tile is bf16 (cast at wrapper boundary); cast the E tile to bf16 for the
    # MXU fast path, accumulate in f32.
    acc_ref[...] += jnp.dot(a_ref[...], emb_ref[...].astype(jnp.bfloat16),
                            preferred_element_type=jnp.float32)

    @pl.when(k == pl.num_programs(1) - 1)
    def _():
        # temp = LeakyReLU((ego + side) @ W_fc + b_fc)   (Dropout == identity)
        z = jnp.dot(ego_ref[...] + acc_ref[...], wfc_ref[...],
                    preferred_element_type=jnp.float32) + bfc_ref[...]
        temp = jnp.where(z > 0, z, NEG_SLOPE * z)
        # group scores + one-hot vs. row-wise top-1 (ties -> multiple 1s,
        # exactly like torch.eq(scores, topk(scores, 1)) in the reference).
        scores = jnp.dot(temp, wg_ref[...],
                         preferred_element_type=jnp.float32) + bg_ref[...]
        top = jnp.max(scores, axis=-1, keepdims=True)
        onehot_ref[...] = (scores == top).astype(jnp.float32)


def _packed_prop_kernel(a_ref, x_ref, s_ref, r_ref, y_ref, sum_ref, acc_ref):
    """One GCN layer for ALL groups at once:
       Y_packed = S_row * (A @ X_packed),  layer_sum = sum_g Y_g (in-kernel)."""
    k = pl.program_id(1)

    @pl.when(k == 0)
    def _():
        acc_ref[...] = jnp.zeros_like(acc_ref)

    acc_ref[...] += jnp.dot(a_ref[...], x_ref[...].astype(jnp.bfloat16),
                            preferred_element_type=jnp.float32)

    @pl.when(k == pl.num_programs(1) - 1)
    def _():
        y = acc_ref[...] * s_ref[...]          # row scale diag(s_g), per group block
        y_ref[...] = y
        # group-sum via block-identity reduce matrix (lane-dense MXU op, keeps
        # the reduction in-kernel instead of an extra (G*N*D) HBM read in XLA).
        sum_ref[...] = jnp.dot(y, r_ref[...], preferred_element_type=jnp.float32)


def _loss_kernel(u_ref, p_ref, n_ref, eu_ref, ep_ref, en_ref, bpr_ref, reg_ref):
    """Fused BPR + L2-regularization losses (single launch, single batch pass)."""
    u, p, n = u_ref[...], p_ref[...], n_ref[...]
    b = float(u.shape[0])
    pos = jnp.sum(u * p, axis=-1, keepdims=True)
    neg = jnp.sum(u * n, axis=-1, keepdims=True)
    x = neg - pos
    # numerically stable softplus(x) = max(x, 0) + log1p(exp(-|x|))
    sp = jnp.maximum(x, 0.0) + jnp.log1p(jnp.exp(-jnp.abs(x)))
    bpr_ref[...] = jnp.sum(sp, axis=0, keepdims=True) / b

    eu, ep, en = eu_ref[...], ep_ref[...], en_ref[...]
    sq = jnp.sum(eu * eu + ep * ep + en * en, axis=(0, 1), keepdims=True)  # (1, 1)
    reg_ref[...] = 0.5 * sq / b


# --------------------------- Pallas wrappers ---------------------------------

def fused_group_assign(a_bf16, all_emb, w_fc, b_fc, w_g, b_g):
    n = a_bf16.shape[0]
    d = all_emb.shape[1]
    g = w_g.shape[1]
    tm = tk = _pick_tile(n)
    grid = (n // tm, n // tk)
    return pl.pallas_call(
        _fused_group_assign_kernel,
        out_shape=jax.ShapeDtypeStruct((n, g), jnp.float32),
        grid_spec=pltpu.PrefetchScalarGridSpec(
            num_scalar_prefetch=0,
            grid=grid,
            in_specs=[
                pl.BlockSpec((tm, tk), lambda i, k: (i, k)),   # A (bf16)
                pl.BlockSpec((tk, d), lambda i, k: (k, 0)),    # E (K operand)
                pl.BlockSpec((tm, d), lambda i, k: (i, 0)),    # ego (row tile)
                pl.BlockSpec((d, d), lambda i, k: (0, 0)),     # W_fc
                pl.BlockSpec((1, d), lambda i, k: (0, 0)),     # b_fc
                pl.BlockSpec((d, g), lambda i, k: (0, 0)),     # W_group
                pl.BlockSpec((1, g), lambda i, k: (0, 0)),     # b_group
            ],
            out_specs=pl.BlockSpec((tm, g), lambda i, k: (i, 0)),
            scratch_shapes=[pltpu.VMEM((tm, d), jnp.float32)],
        ),
        compiler_params=pltpu.CompilerParams(
            dimension_semantics=("parallel", "arbitrary"),
            vmem_limit_bytes=_VMEM_LIMIT),
    )(a_bf16, all_emb, all_emb, w_fc, b_fc, w_g, b_g)


def packed_propagate(a_bf16, x_packed, s_packed, reduce_mat):
    n, gd = x_packed.shape
    d = reduce_mat.shape[1]
    tm = tk = _pick_tile(n)
    grid = (n // tm, n // tk)
    return pl.pallas_call(
        _packed_prop_kernel,
        out_shape=(jax.ShapeDtypeStruct((n, gd), jnp.float32),
                   jax.ShapeDtypeStruct((n, d), jnp.float32)),
        grid_spec=pltpu.PrefetchScalarGridSpec(
            num_scalar_prefetch=0,
            grid=grid,
            in_specs=[
                pl.BlockSpec((tm, tk), lambda i, k: (i, k)),   # A (bf16)
                pl.BlockSpec((tk, gd), lambda i, k: (k, 0)),   # X packed (N, G*D)
                pl.BlockSpec((tm, gd), lambda i, k: (i, 0)),   # row scale (N, G*D)
                pl.BlockSpec((gd, d), lambda i, k: (0, 0)),    # group-sum reducer
            ],
            out_specs=[pl.BlockSpec((tm, gd), lambda i, k: (i, 0)),
                       pl.BlockSpec((tm, d), lambda i, k: (i, 0))],
            scratch_shapes=[pltpu.VMEM((tm, gd), jnp.float32)],
        ),
        compiler_params=pltpu.CompilerParams(
            dimension_semantics=("parallel", "arbitrary"),
            vmem_limit_bytes=_VMEM_LIMIT),
    )(a_bf16, x_packed, s_packed, reduce_mat)


def fused_losses(u, p, n, ego_u, ego_p, ego_n):
    return pl.pallas_call(
        _loss_kernel,
        out_shape=(jax.ShapeDtypeStruct((1, 1), jnp.float32),
                   jax.ShapeDtypeStruct((1, 1), jnp.float32)),
    )(u, p, n, ego_u, ego_p, ego_n)


# --------------------------- Model (JAX glue) --------------------------------

def aggregate(params, graph_bf16, num_users, num_items, num_groups, num_layers):
    all_emb = jnp.concatenate([params["user_emb"], params["item_emb"]], axis=0)  # (N, D)
    n, d = all_emb.shape

    # Fused: side = A@E, temp = LeakyReLU(FC(ego + side)), group one-hot.
    onehot = fused_group_assign(graph_bf16, all_emb,
                                params["fc_w"], params["fc_b"],
                                params["fcg_w"], params["fcg_b"])                # (N, G)

    user_group = onehot[:num_users]
    item_group = jnp.ones((num_items, num_groups), jnp.float32)                  # items in all groups
    group_scale = jnp.concatenate([user_group, item_group], axis=0)              # (N, G)

    # Packed per-group scale: column block g of (N, G*D) holds s_g broadcast over D.
    s_packed = jnp.repeat(group_scale, d, axis=1)                                # (N, G*D)

    # Layer-0 packed input, pre-column-scaled: X_g^(0) scaled = s_g * all_emb.
    # (s is binary => idempotent, so later layers need no column scale.)
    x_packed = jnp.tile(all_emb, (1, num_groups)) * s_packed                     # (N, G*D)

    # Block-identity matrix for the in-kernel group-sum: (G*D, D).
    reduce_mat = jnp.tile(jnp.eye(d, dtype=jnp.float32), (num_groups, 1))

    # layer 0 sum: all G group embeddings equal all_emb (unscaled) in the reference.
    # Accumulate the per-layer group-sums incrementally (no (L, N, D) stack).
    final_sum = float(num_groups) * all_emb
    for _ in range(1, num_layers):
        x_packed, lsum = packed_propagate(graph_bf16, x_packed, s_packed, reduce_mat)
        final_sum = final_sum + lsum

    final = final_sum / float(num_layers)                                         # (N, D)
    return final[:num_users], final[num_users:]


def impgcn_forward(params, graph, user, positive, negative, cfg):
    # Cast the dominant (N, N) operand to bf16 once (f32 accumulation in-kernel).
    graph_bf16 = graph.astype(jnp.bfloat16)
    users_emb, items_emb = aggregate(params, graph_bf16, cfg["num_users"],
                                     cfg["num_items"], cfg["num_groups"],
                                     cfg["num_layers"])
    u = users_emb[user]
    p = items_emb[positive]
    n = items_emb[negative]
    ego_u = params["user_emb"][user]
    ego_p = params["item_emb"][positive]
    ego_n = params["item_emb"][negative]

    bpr, reg = fused_losses(u, p, n, ego_u, ego_p, ego_n)
    return bpr[0, 0], cfg["reg_lambda"] * reg[0, 0]


# --------------------------- Deterministic setup -----------------------------

def xavier_uniform(key, shape, gain=1.0):
    fan_in, fan_out = shape[0], shape[1]
    bound = gain * (6.0 / (fan_in + fan_out)) ** 0.5
    return jax.random.uniform(key, shape, jnp.float32, -bound, bound)


def linear_init(key, fan_in, fan_out):
    kw, kb = jax.random.split(key)
    bound = 1.0 / (fan_in ** 0.5)
    w = jax.random.uniform(kw, (fan_in, fan_out), jnp.float32, -bound, bound)  # (in, out)
    b = jax.random.uniform(kb, (1, fan_out), jnp.float32, -bound, bound)
    return w, b


def build_norm_adj(key, num_users, num_items):
    # Densified, symmetrically normalized bipartite adjacency, standing in for
    # utility_data.data_graph.sparse_adjacency_matrix.
    n = num_users + num_items
    r = (jax.random.uniform(key, (num_users, num_items)) < 0.2).astype(jnp.float32)
    a = jnp.zeros((n, n), jnp.float32)
    a = a.at[:num_users, num_users:].set(r)
    a = a.at[num_users:, :num_users].set(r.T)
    deg = jnp.sum(a, axis=1)
    dinv = jnp.where(deg > 0, 1.0 / jnp.sqrt(jnp.maximum(deg, 1e-12)), 0.0)
    return dinv[:, None] * a * dinv[None, :]


if __name__ == "__main__":
    # N = 384 -> 128-tiles, 3x3 grid, exercises the K-accumulation path.
    num_users, num_items = 144, 240
    emb_dim = 32
    num_groups = 4            # G*D = 128 -> lane-dense packed propagation
    num_layers = 3
    reg_lambda = 1e-4
    batch = 8

    cfg = dict(num_users=num_users, num_items=num_items, num_groups=num_groups,
               num_layers=num_layers, reg_lambda=reg_lambda)

    key = jax.random.PRNGKey(0)
    k_ue, k_ie, k_fc, k_fcg, k_graph, k_u, k_p, k_n = jax.random.split(key, 8)

    fc_w, fc_b = linear_init(k_fc, emb_dim, emb_dim)
    fcg_w, fcg_b = linear_init(k_fcg, emb_dim, num_groups)
    params = {
        "user_emb": xavier_uniform(k_ue, (num_users, emb_dim)),
        "item_emb": xavier_uniform(k_ie, (num_items, emb_dim)),
        "fc_w": fc_w, "fc_b": fc_b,
        "fcg_w": fcg_w, "fcg_b": fcg_b,
    }
    graph = build_norm_adj(k_graph, num_users, num_items)

    user = jax.random.randint(k_u, (batch,), 0, num_users, jnp.int32)
    positive = jax.random.randint(k_p, (batch,), 0, num_items, jnp.int32)
    negative = jax.random.randint(k_n, (batch,), 0, num_items, jnp.int32)

    bpr, reg = impgcn_forward(params, graph, user, positive, negative, cfg)
    jax.block_until_ready((bpr, reg))
    print("KERNEL_OK")
</pallas_src>

<mosaic_0001>
module attributes {stable_mosaic.version = 11 : i64} {
  func.func @_fused_group_assign_kernel(%arg0: i32, %arg1: i32, %arg2: memref<128x128xbf16, #tpu.memory_space<vmem>>, %arg3: memref<128x32xf32, #tpu.memory_space<vmem>>, %arg4: memref<128x32xf32, #tpu.memory_space<vmem>>, %arg5: memref<32x32xf32, #tpu.memory_space<vmem>>, %arg6: memref<1x32xf32, #tpu.memory_space<vmem>>, %arg7: memref<32x4xf32, #tpu.memory_space<vmem>>, %arg8: memref<1x4xf32, #tpu.memory_space<vmem>>, %arg9: memref<128x4xf32, #tpu.memory_space<vmem>>, %arg10: memref<128x32xf32, #tpu.memory_space<vmem>>) attributes {dimension_semantics = [#tpu.dimension_semantics<parallel>, #tpu.dimension_semantics<arbitrary>], iteration_bounds = array<i64: 3, 3>, scalar_prefetch = 0 : i64, scratch_operands = 1 : i64, tpu.core_type = #tpu.core_type<tc>, window_params = [{transform_indices = @transform_0, window_bounds = array<i64: 128, 128>}, {transform_indices = @transform_1, window_bounds = array<i64: 128, 32>}, {transform_indices = @transform_2, window_bounds = array<i64: 128, 32>}, {pipeline_mode = #tpu.pipeline_mode<synchronous>, transform_indices = @transform_3, window_bounds = array<i64: 32, 32>}, {pipeline_mode = #tpu.pipeline_mode<synchronous>, transform_indices = @transform_4, window_bounds = array<i64: 1, 32>}, {pipeline_mode = #tpu.pipeline_mode<synchronous>, transform_indices = @transform_5, window_bounds = array<i64: 32, 4>}, {pipeline_mode = #tpu.pipeline_mode<synchronous>, transform_indices = @transform_6, window_bounds = array<i64: 1, 4>}, {transform_indices = @transform_7, window_bounds = array<i64: 128, 4>}]} {
    %c0_i32 = arith.constant 0 : i32
    %0 = arith.cmpi eq, %arg1, %c0_i32 : i32
    %1 = arith.extui %0 : i1 to i32
    %c0_i32_0 = arith.constant 0 : i32
    %2 = arith.cmpi ne, %1, %c0_i32_0 : i32
    scf.if %2 {
      %cst_9 = arith.constant 0.000000e+00 : f32
      %13 = vector.broadcast %cst_9 : f32 to vector<128x32xf32>
      %c0_10 = arith.constant 0 : index
      %c0_11 = arith.constant 0 : index
      %14 = vector.load %arg10[%c0_10, %c0_11] : memref<128x32xf32, #tpu.memory_space<vmem>>, vector<128x32xf32>
      tpu.vector_store %arg10[%c0_10, %c0_11], %13 {strides = array<i32>} : memref<128x32xf32, #tpu.memory_space<vmem>>, vector<128x32xf32>,
    } else {
    }
    %c0 = arith.constant 0 : index
    %c0_1 = arith.constant 0 : index
    %3 = vector.load %arg10[%c0, %c0_1] : memref<128x32xf32, #tpu.memory_space<vmem>>, vector<128x32xf32>
    %c0_2 = arith.constant 0 : index
    %c0_3 = arith.constant 0 : index
    %4 = vector.load %arg2[%c0_2, %c0_3] : memref<128x128xbf16, #tpu.memory_space<vmem>>, vector<128x128xbf16>
    %c0_4 = arith.constant 0 : index
    %c0_5 = arith.constant 0 : index
    %5 = vector.load %arg3[%c0_4, %c0_5] : memref<128x32xf32, #tpu.memory_space<vmem>>, vector<128x32xf32>
    %6 = arith.truncf %5 : vector<128x32xf32> to vector<128x32xbf16>
    %cst = arith.constant dense<0.000000e+00> : vector<128x32xf32>
    %7 = tpu.matmul %4, %6, %cst {dimension_numbers = #tpu.dot_dimension_numbers<[1], [0], [0], [1], [0, 0, 1, 1], [], []>} : vector<128x128xbf16>, vector<128x32xbf16>, vector<128x32xf32> -> vector<128x32xf32>
    %8 = arith.addf %3, %7 : vector<128x32xf32>
    %c0_6 = arith.constant 0 : index
    %c0_7 = arith.constant 0 : index
    %9 = vector.load %arg10[%c0_6, %c0_7] : memref<128x32xf32, #tpu.memory_space<vmem>>, vector<128x32xf32>
    tpu.vector_store %arg10[%c0_6, %c0_7], %8 {strides = array<i32>} : memref<128x32xf32, #tpu.memory_space<vmem>>, vector<128x32xf32>,
    %c2_i32 = arith.constant 2 : i32
    %10 = arith.cmpi eq, %arg1, %c2_i32 : i32
    %11 = arith.extui %10 : i1 to i32
    %c0_i32_8 = arith.constant 0 : i32
    %12 = arith.cmpi ne, %11, %c0_i32_8 : i32
    scf.if %12 {
      %c0_9 = arith.constant 0 : index
      %c0_10 = arith.constant 0 : index
      %13 = vector.load %arg4[%c0_9, %c0_10] : memref<128x32xf32, #tpu.memory_space<vmem>>, vector<128x32xf32>
      %c0_11 = arith.constant 0 : index
      %c0_12 = arith.constant 0 : index
      %14 = vector.load %arg10[%c0_11, %c0_12] : memref<128x32xf32, #tpu.memory_space<vmem>>, vector<128x32xf32>
      %15 = arith.addf %13, %14 : vector<128x32xf32>
      %c0_13 = arith.constant 0 : index
      %c0_14 = arith.constant 0 : index
      %16 = vector.load %arg5[%c0_13, %c0_14] : memref<32x32xf32, #tpu.memory_space<vmem>>, vector<32x32xf32>
      %cst_15 = arith.constant dense<0.000000e+00> : vector<128x32xf32>
      %17 = tpu.matmul %15, %16, %cst_15 {dimension_numbers = #tpu.dot_dimension_numbers<[1], [0], [0], [1], [0, 0, 1, 1], [], []>} : vector<128x32xf32>, vector<32x32xf32>, vector<128x32xf32> -> vector<128x32xf32>
      %c0_16 = arith.constant 0 : index
      %c0_17 = arith.constant 0 : index
      %18 = vector.load %arg6[%c0_16, %c0_17] : memref<1x32xf32, #tpu.memory_space<vmem>>, vector<1x32xf32>
      %19 = vector.broadcast %18 : vector<1x32xf32> to vector<128x32xf32>
      %20 = arith.addf %17, %19 : vector<128x32xf32>
      %cst_18 = arith.constant 0.000000e+00 : f32
      %21 = vector.broadcast %cst_18 : f32 to vector<128x32xf32>
      %22 = arith.cmpf ogt, %20, %21 : vector<128x32xf32>
      %cst_19 = arith.constant 0.00999999977 : f32
      %23 = vector.broadcast %cst_19 : f32 to vector<128x32xf32>
      %24 = arith.mulf %23, %20 : vector<128x32xf32>
      %25 = arith.select %22, %20, %24 : vector<128x32xi1>, vector<128x32xf32>
      %c0_20 = arith.constant 0 : index
      %c0_21 = arith.constant 0 : index
      %26 = vector.load %arg7[%c0_20, %c0_21] : memref<32x4xf32, #tpu.memory_space<vmem>>, vector<32x4xf32>
      %cst_22 = arith.constant dense<0.000000e+00> : vector<128x4xf32>
      %27 = tpu.matmul %25, %26, %cst_22 {dimension_numbers = #tpu.dot_dimension_numbers<[1], [0], [0], [1], [0, 0, 1, 1], [], []>} : vector<128x32xf32>, vector<32x4xf32>, vector<128x4xf32> -> vector<128x4xf32>
      %c0_23 = arith.constant 0 : index
      %c0_24 = arith.constant 0 : index
      %28 = vector.load %arg8[%c0_23, %c0_24] : memref<1x4xf32, #tpu.memory_space<vmem>>, vector<1x4xf32>
      %29 = vector.broadcast %28 : vector<1x4xf32> to vector<128x4xf32>
      %30 = arith.addf %27, %29 : vector<128x4xf32>
      %cst_25 = arith.constant dense<0xFF800000> : vector<128xf32>
      %31 = vector.multi_reduction <maximumf>, %30, %cst_25 [1] : vector<128x4xf32> to vector<128xf32>
      %32 = vector.shape_cast %31 : vector<128xf32> to vector<128x1xf32>
      %33 = vector.broadcast %32 : vector<128x1xf32> to vector<128x4xf32>
      %34 = arith.cmpf oeq, %30, %33 : vector<128x4xf32>
      %35 = arith.extui %34 : vector<128x4xi1> to vector<128x4xi32>
      %36 = arith.sitofp %35 : vector<128x4xi32> to vector<128x4xf32>
      %c0_26 = arith.constant 0 : index
      %c0_27 = arith.constant 0 : index
      %37 = vector.load %arg9[%c0_26, %c0_27] : memref<128x4xf32, #tpu.memory_space<vmem>>, vector<128x4xf32>
      tpu.vector_store %arg9[%c0_26, %c0_27], %36 {strides = array<i32>} : memref<128x4xf32, #tpu.memory_space<vmem>>, vector<128x4xf32>,
    } else {
    }
    return
  }
  func.func @transform_0(%arg0: i32, %arg1: i32) -> (i32, i32) {
    %c0_i32 = arith.constant 0 : i32
    return %arg0, %arg1 : i32, i32
  }
  func.func @transform_1(%arg0: i32, %arg1: i32) -> (i32, i32) {
    %c0_i32 = arith.constant 0 : i32
    %c0_i32_0 = arith.constant 0 : i32
    return %arg1, %c0_i32 : i32, i32
  }
  func.func @transform_2(%arg0: i32, %arg1: i32) -> (i32, i32) {
    %c0_i32 = arith.constant 0 : i32
    %c0_i32_0 = arith.constant 0 : i32
    return %arg0, %c0_i32 : i32, i32
  }
  func.func @transform_3(%arg0: i32, %arg1: i32) -> (i32, i32) {
    %c0_i32 = arith.constant 0 : i32
    %c0_i32_0 = arith.constant 0 : i32
    %c0_i32_1 = arith.constant 0 : i32
    return %c0_i32, %c0_i32_0 : i32, i32
  }
  func.func @transform_4(%arg0: i32, %arg1: i32) -> (i32, i32) {
    %c0_i32 = arith.constant 0 : i32
    %c0_i32_0 = arith.constant 0 : i32
    %c0_i32_1 = arith.constant 0 : i32
    return %c0_i32, %c0_i32_0 : i32, i32
  }
  func.func @transform_5(%arg0: i32, %arg1: i32) -> (i32, i32) {
    %c0_i32 = arith.constant 0 : i32
    %c0_i32_0 = arith.constant 0 : i32
    %c0_i32_1 = arith.constant 0 : i32
    return %c0_i32, %c0_i32_0 : i32, i32
  }
  func.func @transform_6(%arg0: i32, %arg1: i32) -> (i32, i32) {
    %c0_i32 = arith.constant 0 : i32
    %c0_i32_0 = arith.constant 0 : i32
    %c0_i32_1 = arith.constant 0 : i32
    return %c0_i32, %c0_i32_0 : i32, i32
  }
  func.func @transform_7(%arg0: i32, %arg1: i32) -> (i32, i32) {
    %c0_i32 = arith.constant 0 : i32
    %c0_i32_0 = arith.constant 0 : i32
    return %arg0, %c0_i32 : i32, i32
  }
}

</mosaic_0001>

<llo_original>
// kernel: tpu_custom_call.1
$region0: #{tpu_custom_call.1}
  #allocation0 [shape = 'u32[]', space=smem, size = 0x4, offset = 0x4, fixed_abs, tag = 'smem constant byte address 0x4 - core index']
  #allocation1 [shape = 'u32[144,128]{1,0:T(1,128)}', space=vmem, size = 0x12000, scoped, tag = 'internal scratch']
  #allocation2 [shape = 'f32[128,32]{1,0:T(8,128)}', space=vmem, size = 0x10000, scoped, tag = 'scratch operand']
  %s0 = inlined_call_operand.vmem [shape: bf16[384,384], index: 0, kind: input, shape index: {}]
  %s1 = inlined_call_operand.vmem [shape: f32[384,32], index: 1, kind: input, shape index: {}]
  %s2 = inlined_call_operand.vmem [shape: f32[384,32], index: 2, kind: input, shape index: {}]
  %s3 = inlined_call_operand.vmem [shape: f32[32,32], index: 3, kind: input, shape index: {}]
  %s4 = inlined_call_operand.vmem [shape: f32[1,32], index: 4, kind: input, shape index: {}]
  %s5 = inlined_call_operand.vmem [shape: f32[32,4], index: 5, kind: input, shape index: {}]
  %s6 = inlined_call_operand.vmem [shape: f32[1,4], index: 6, kind: input, shape index: {}]
  %s7 = inlined_call_operand.vmem [shape: f32[384,4], index: 7, kind: output, shape index: {}]
  %s8 = sld [smem:[#allocation0]]
  $region110: #{tpu_custom_call.1} parent=0
    _
  %s10 = ssub.s32 1, %s8
  %s11 = scalar_select 0, %s10, %s8
  $region1: #{tpu_custom_call.1} parent=0
    #allocation3 [shape = 'u8[65536]{0}', space=vmem, size = 0x10000, scoped, tag = 'input window, operand 0']
    loop: start=0, step=1, limit=11
    $region2: #{tpu_custom_call.1} parent=1 // loop_pre_header
      _
    $region3: #{tpu_custom_call.1} parent=1 // loop_header
      %s13 = sphi 0, %s17
      %p14 = scmp.ge.s32.totalorder %s13, 11
      %s20 = sphi 0, %s32
      %s21 = sphi 0, %s28
      %s22 = sphi 0, %s20
      %s23 = sphi 0, %s21
      %s24 = sphi 0, %s22
      %s25 = sphi 0, %s23
      %s37 = sphi 0, %s39
      %s40 = sphi 0, %s37
      %s41 = sphi 0, %s40
      %s57 = sphi 0, %s41
      %s63 = sphi 0, %s65
      %s66 = sphi 0, %s63
      %s67 = sphi 0, %s66
      %s83 = sphi 0, %s67
      %s89 = sphi 0, %s91
      %s92 = sphi 0, %s89
      %s93 = sphi 0, %s92
      %s109 = sphi 0, %s93
      %s113 = sphi 0, %s113
      %s115 = sphi 0, %s113
      %s116 = sphi 0, %s115
      %s130 = sphi 0, %s116
      %s134 = sphi 0, %s134
      %s136 = sphi 0, %s134
      %s137 = sphi 0, %s136
      %s151 = sphi 0, %s137
      %s155 = sphi 0, %s155
      %s157 = sphi 0, %s155
      %s158 = sphi 0, %s157
      %s172 = sphi 0, %s158
      %s176 = sphi 0, %s176
      %s178 = sphi 0, %s176
      %s179 = sphi 0, %s178
      %s193 = sphi 0, %s179
      %s199 = sphi 0, %s201
      %s202 = sphi 0, %s199
      %s203 = sphi 0, %s202
      %s219 = sphi 0, %s203
    $region4: #{tpu_custom_call.1} parent=1 // loop_header_branch
      %16 = sbr.rel (%p14) target = $region8
    $region5: #{tpu_custom_call.1} parent=1 // loop_body
      %s18 = ssub.s32 %s13, 1
      %s19 = ssub.s32 %s13, 2
      %s26 = sadd.s32 1, %s21
      %p27 = scmp.ge.s32.totalorder %s26, 3
      %s28 = scalar_select %p27, 0, %s26
      %s29 = sadd.s32 1, %s20
      %s30 = scalar_select %p27, %s29, %s20
      %p31 = scmp.ge.s32.totalorder %s30, 3
      %s32 = scalar_select %p31, 0, %s30
      %s33 = ssub.s32 %s20, %s32
      %s34 = ssub.s32 %s21, %s28
      %s35 = sor.u32 %s33, %s34
      %p36 = scmp.eq.s32.totalorder %s35, 0
      %s38 = sadd.s32 %s37, 1
      %s39 = scalar_select %p36, %s37, %s38
      %p42 = pneg %p36
      %p43 = scmp.eq.s32.totalorder %s13, 8
      %p44 = por %p42, %p43
      %p45 = scmp.ne.s32.totalorder %s37, %s40
      %p46 = scmp.eq.s32.totalorder %s13, 0
      %p47 = por %p45, %p46
      %p48 = scmp.ne.s32.totalorder %s37, %s40
      %p49 = scmp.eq.s32.totalorder %s18, 8
      %p50 = por %p48, %p49
      %p51 = scmp.ne.s32.totalorder %s40, %s41
      %p52 = scmp.eq.s32.totalorder %s18, 0
      %p53 = por %p51, %p52
      %p54 = scmp.ne.s32.totalorder %s40, %s41
      %p55 = scmp.eq.s32.totalorder %s19, 8
      %p56 = por %p54, %p55
      %p58 = scmp.ne.s32.totalorder %s41, %s57
      %p59 = scmp.eq.s32.totalorder %s19, 0
      %p60 = por %p58, %p59
      %s61 = ssub.s32 %s21, %s28
      %p62 = scmp.eq.s32.totalorder %s61, 0
      %s64 = sadd.s32 %s63, 1
      %s65 = scalar_select %p62, %s63, %s64
      %p68 = pneg %p62
      %p69 = scmp.eq.s32.totalorder %s13, 8
      %p70 = por %p68, %p69
      %p71 = scmp.ne.s32.totalorder %s63, %s66
      %p72 = scmp.eq.s32.totalorder %s13, 0
      %p73 = por %p71, %p72
      %p74 = scmp.ne.s32.totalorder %s63, %s66
      %p75 = scmp.eq.s32.totalorder %s18, 8
      %p76 = por %p74, %p75
      %p77 = scmp.ne.s32.totalorder %s66, %s67
      %p78 = scmp.eq.s32.totalorder %s18, 0
      %p79 = por %p77, %p78
      %p80 = scmp.ne.s32.totalorder %s66, %s67
      %p81 = scmp.eq.s32.totalorder %s19, 8
      %p82 = por %p80, %p81
      %p84 = scmp.ne.s32.totalorder %s67, %s83
      %p85 = scmp.eq.s32.totalorder %s19, 0
      %p86 = por %p84, %p85
      %s87 = ssub.s32 %s20, %s32
      %p88 = scmp.eq.s32.totalorder %s87, 0
      %s90 = sadd.s32 %s89, 1
      %s91 = scalar_select %p88, %s89, %s90
      %p94 = pneg %p88
      %p95 = scmp.eq.s32.totalorder %s13, 8
      %p96 = por %p94, %p95
      %p97 = scmp.ne.s32.totalorder %s89, %s92
      %p98 = scmp.eq.s32.totalorder %s13, 0
      %p99 = por %p97, %p98
      %p100 = scmp.ne.s32.totalorder %s89, %s92
      %p101 = scmp.eq.s32.totalorder %s18, 8
      %p102 = por %p100, %p101
      %p103 = scmp.ne.s32.totalorder %s92, %s93
      %p104 = scmp.eq.s32.totalorder %s18, 0
      %p105 = por %p103, %p104
      %p106 = scmp.ne.s32.totalorder %s92, %s93
      %p107 = scmp.eq.s32.totalorder %s19, 8
      %p108 = por %p106, %p107
      %p110 = scmp.ne.s32.totalorder %s93, %s109
      %p111 = scmp.eq.s32.totalorder %s19, 0
      %p112 = por %p110, %p111
      %s114 = sadd.s32 %s113, 1
      %p117 = scmp.eq.s32.totalorder %s13, 8
      %p118 = scmp.ne.s32.totalorder %s113, %s115
      %p119 = scmp.eq.s32.totalorder %s13, 0
      %p120 = por %p118, %p119
      %p121 = scmp.ne.s32.totalorder %s113, %s115
      %p122 = scmp.eq.s32.totalorder %s18, 8
      %p123 = por %p121, %p122
      %p124 = scmp.ne.s32.totalorder %s115, %s116
      %p125 = scmp.eq.s32.totalorder %s18, 0
      %p126 = por %p124, %p125
      %p127 = scmp.ne.s32.totalorder %s115, %s116
      %p128 = scmp.eq.s32.totalorder %s19, 8
      %p129 = por %p127, %p128
      %p131 = scmp.ne.s32.totalorder %s116, %s130
      %p132 = scmp.eq.s32.totalorder %s19, 0
      %p133 = por %p131, %p132
      %s135 = sadd.s32 %s134, 1
      %p138 = scmp.eq.s32.totalorder %s13, 8
      %p139 = scmp.ne.s32.totalorder %s134, %s136
      %p140 = scmp.eq.s32.totalorder %s13, 0
      %p141 = por %p139, %p140
      %p142 = scmp.ne.s32.totalorder %s134, %s136
      %p143 = scmp.eq.s32.totalorder %s18, 8
      %p144 = por %p142, %p143
      %p145 = scmp.ne.s32.totalorder %s136, %s137
      %p146 = scmp.eq.s32.totalorder %s18, 0
      %p147 = por %p145, %p146
      %p148 = scmp.ne.s32.totalorder %s136, %s137
      %p149 = scmp.eq.s32.totalorder %s19, 8
      %p150 = por %p148, %p149
      %p152 = scmp.ne.s32.totalorder %s137, %s151
      %p153 = scmp.eq.s32.totalorder %s19, 0
      %p154 = por %p152, %p153
      %s156 = sadd.s32 %s155, 1
      %p159 = scmp.eq.s32.totalorder %s13, 8
      %p160 = scmp.ne.s32.totalorder %s155, %s157
      %p161 = scmp.eq.s32.totalorder %s13, 0
      %p162 = por %p160, %p161
      %p163 = scmp.ne.s32.totalorder %s155, %s157
      %p164 = scmp.eq.s32.totalorder %s18, 8
      %p165 = por %p163, %p164
      %p166 = scmp.ne.s32.totalorder %s157, %s158
      %p167 = scmp.eq.s32.totalorder %s18, 0
      %p168 = por %p166, %p167
      %p169 = scmp.ne.s32.totalorder %s157, %s158
      %p170 = scmp.eq.s32.totalorder %s19, 8
      %p171 = por %p169, %p170
      %p173 = scmp.ne.s32.totalorder %s158, %s172
      %p174 = scmp.eq.s32.totalorder %s19, 0
      %p175 = por %p173, %p174
      %s177 = sadd.s32 %s176, 1
      %p180 = scmp.eq.s32.totalorder %s13, 8
      %p181 = scmp.ne.s32.totalorder %s176, %s178
      %p182 = scmp.eq.s32.totalorder %s13, 0
      %p183 = por %p181, %p182
      %p184 = scmp.ne.s32.totalorder %s176, %s178
      %p185 = scmp.eq.s32.totalorder %s18, 8
      %p186 = por %p184, %p185
      %p187 = scmp.ne.s32.totalorder %s178, %s179
      %p188 = scmp.eq.s32.totalorder %s18, 0
      %p189 = por %p187, %p188
      %p190 = scmp.ne.s32.totalorder %s178, %s179
      %p191 = scmp.eq.s32.totalorder %s19, 8
      %p192 = por %p190, %p191
      %p194 = scmp.ne.s32.totalorder %s179, %s193
      %p195 = scmp.eq.s32.totalorder %s19, 0
      %p196 = por %p194, %p195
      %s197 = ssub.s32 %s20, %s32
      %p198 = scmp.eq.s32.totalorder %s197, 0
      %s200 = sadd.s32 %s199, 1
      %s201 = scalar_select %p198, %s199, %s200
      %p204 = pneg %p198
      %p205 = scmp.eq.s32.totalorder %s13, 8
      %p206 = por %p204, %p205
      %p207 = scmp.ne.s32.totalorder %s199, %s202
      %p208 = scmp.eq.s32.totalorder %s13, 0
      %p209 = por %p207, %p208
      %p210 = scmp.ne.s32.totalorder %s199, %s202
      %p211 = scmp.eq.s32.totalorder %s18, 8
      %p212 = por %p210, %p211
      %p213 = scmp.ne.s32.totalorder %s202, %s203
      %p214 = scmp.eq.s32.totalorder %s18, 0
      %p215 = por %p213, %p214
      %p216 = scmp.ne.s32.totalorder %s202, %s203
      %p217 = scmp.eq.s32.totalorder %s19, 8
      %p218 = por %p216, %p217
      %p220 = scmp.ne.s32.totalorder %s203, %s219
      %p221 = scmp.eq.s32.totalorder %s19, 0
      %p222 = por %p220, %p221
      %p223 = scmp.le.s32.totalorder 1, %s13
      %p224 = scmp.lt.s32.totalorder %s13, 10
      %p225 = pnand %p223, %p224
      %p226 = pneg %p225
      // Predicated region
      $region9: #{tpu_custom_call.1} parent=5 // pred_check
        _
      $region10: #{tpu_custom_call.1} parent=5 // pred_check_branch
        %228 = sbr.rel (%p225) target = $region12
      $region11: #{tpu_custom_call.1} parent=5 // pred_region
        %s229 = ssub.s32 %s13, 1
        // Predicated region
        $region13: #{tpu_custom_call.1} parent=11 // pred_check
          %p230 = pneg %p126
        $region14: #{tpu_custom_call.1} parent=11 // pred_check_branch
          %232 = sbr.rel (%p230) target = $region16
        $region15: #{tpu_custom_call.1} parent=11 // pred_region
          _
        $region16: #{tpu_custom_call.1} parent=11 // pred_fallthru
          _
        // Predicated region
        $region17: #{tpu_custom_call.1} parent=11 // pred_check
          %p233 = pneg %p147
        $region18: #{tpu_custom_call.1} parent=11 // pred_check_branch
          %235 = sbr.rel (%p233) target = $region20
        $region19: #{tpu_custom_call.1} parent=11 // pred_region
          _
        $region20: #{tpu_custom_call.1} parent=11 // pred_fallthru
          _
        // Predicated region
        $region21: #{tpu_custom_call.1} parent=11 // pred_check
          %p236 = pneg %p168
        $region22: #{tpu_custom_call.1} parent=11 // pred_check_branch
          %238 = sbr.rel (%p236) target = $region24
        $region23: #{tpu_custom_call.1} parent=11 // pred_region
          _
        $region24: #{tpu_custom_call.1} parent=11 // pred_fallthru
          _
        // Predicated region
        $region25: #{tpu_custom_call.1} parent=11 // pred_check
          %p239 = pneg %p189
        $region26: #{tpu_custom_call.1} parent=11 // pred_check_branch
          %241 = sbr.rel (%p239) target = $region28
        $region27: #{tpu_custom_call.1} parent=11 // pred_region
          _
        $region28: #{tpu_custom_call.1} parent=11 // pred_fallthru
          _
      $region12: #{tpu_custom_call.1} parent=5 // pred_fallthru
        _
      %p242 = scmp.lt.s32.totalorder %s13, 9
      // Predicated region
      $region29: #{tpu_custom_call.1} parent=5 // pred_check
        %p243 = pneg %p242
      $region30: #{tpu_custom_call.1} parent=5 // pred_check_branch
        %245 = sbr.rel (%p243) target = $region32
      $region31: #{tpu_custom_call.1} parent=5 // pred_region
        // Predicated region
        $region33: #{tpu_custom_call.1} parent=31 // pred_check
          %p246 = pneg %p47
        $region34: #{tpu_custom_call.1} parent=31 // pred_check_branch
          %248 = sbr.rel (%p246) target = $region36
        $region35: #{tpu_custom_call.1} parent=31 // pred_region
          %s249 = sand.u32 %s37, 1
          %s250 = sand.u32 %s37, 1
          %s251 = smul.addr %s250, 64
          %s252 = scalar_lea.vmem [#allocation3], %s251
          %s253 = smul.u32 16, %s20
          %s254 = smul.addr %s253, 3
          %s255 = sadd.s32 %s21, %s254
          %s256 = smul.addr %s255, 4
          %s257 = scalar_lea.vmem %s0, %s256
          // Predicated region
          $region37: #{tpu_custom_call.1} parent=35 // pred_check
            _
          $region38: #{tpu_custom_call.1} parent=35 // pred_check_branch
            %259 = sbr.rel (0) target = $region40
          $region39: #{tpu_custom_call.1} parent=35 // pred_region
            // Predicated region
            $region41: #{tpu_custom_call.1} parent=39 // pred_check
              _
            $region42: #{tpu_custom_call.1} parent=39 // pred_check_branch
              %261 = sbr.rel target = $region44
            $region43: #{tpu_custom_call.1} parent=39 // pred_region
              // Predicated region
              $region56: #{tpu_custom_call.1} parent=43 // pred_check
                _
              $region57: #{tpu_custom_call.1} parent=43 // pred_check_branch
                %306 = sbr.rel (0) target = $region59
              $region58: #{tpu_custom_call.1} parent=43 // pred_region
                loop: start=0, step=1, limit=1
                $region60: #{tpu_custom_call.1} parent=58 // loop_pre_header
                  _
                $region61: #{tpu_custom_call.1} parent=58 // loop_header
                  %s308 = sphi 0, %s312
                  %p309 = scmp.ge.s32.totalorder %s308, 1
                  %s313 = sphi %s257, %s257
                  %s314 = sphi %s252, %s252
                $region62: #{tpu_custom_call.1} parent=58 // loop_header_branch
                  %311 = sbr.rel (%p309) target = $region66
                $region63: #{tpu_custom_call.1} parent=58 // loop_body
                  _
                $region64: #{tpu_custom_call.1} parent=58 // loop_footer
                  %s312 = sadd.s32 1, %s308
                $region65: #{tpu_custom_call.1} parent=58 // loop_footer_branch
                  %307 = sbr.rel target = $region61
                $region66: #{tpu_custom_call.1} parent=58 // loop_exit
                  _
                loop: start=0, step=1, limit=1
                $region67: #{tpu_custom_call.1} parent=58 // loop_pre_header
                  _
                $region68: #{tpu_custom_call.1} parent=58 // loop_header
                  %s317 = sphi 0, %s321
                  %p318 = scmp.ge.s32.totalorder %s317, 1
                  %s322 = sphi %s257, %s257
                  %s323 = sphi %s252, %s252
                $region69: #{tpu_custom_call.1} parent=58 // loop_header_branch
                  %320 = sbr.rel (%p318) target = $region73
                $region70: #{tpu_custom_call.1} parent=58 // loop_body
                  %v324 = vld [vmem:[%s322] sm:$0xf]
                  %325 = vst [vmem:[%s323] sm:$0xf] %v324
                  %v326 = vld [vmem:[%s322 + $0xc] sm:$0xf]
                  %327 = vst [vmem:[%s323 + $0x4] sm:$0xf] %v326
                  %v328 = vld [vmem:[%s322 + $0x18] sm:$0xf]
                  %329 = vst [vmem:[%s323 + $0x8] sm:$0xf] %v328
                  %v330 = vld [vmem:[%s322 + $0x24] sm:$0xf]
                  %331 = vst [vmem:[%s323 + $0xc] sm:$0xf] %v330
                  %v332 = vld [vmem:[%s322 + $0x30] sm:$0xf]
                  %333 = vst [vmem:[%s323 + $0x10] sm:$0xf] %v332
                  %v334 = vld [vmem:[%s322 + $0x3c] sm:$0xf]
                  %335 = vst [vmem:[%s323 + $0x14] sm:$0xf] %v334
                  %v336 = vld [vmem:[%s322 + $0x48] sm:$0xf]
                  %337 = vst [vmem:[%s323 + $0x18] sm:$0xf] %v336
                  %v338 = vld [vmem:[%s322 + $0x54] sm:$0xf]
                  %339 = vst [vmem:[%s323 + $0x1c] sm:$0xf] %v338
                  %v340 = vld [vmem:[%s322 + $0x60] sm:$0xf]
                  %341 = vst [vmem:[%s323 + $0x20] sm:$0xf] %v340
                  %v342 = vld [vmem:[%s322 + $0x6c] sm:$0xf]
                  %343 = vst [vmem:[%s323 + $0x24] sm:$0xf] %v342
                  %v344 = vld [vmem:[%s322 + $0x78] sm:$0xf]
                  %345 = vst [vmem:[%s323 + $0x28] sm:$0xf] %v344
                  %v346 = vld [vmem:[%s322 + $0x84] sm:$0xf]
                  %347 = vst [vmem:[%s323 + $0x2c] sm:$0xf] %v346
                  %v348 = vld [vmem:[%s322 + $0x90] sm:$0xf]
                  %349 = vst [vmem:[%s323 + $0x30] sm:$0xf] %v348
                  %v350 = vld [vmem:[%s322 + $0x9c] sm:$0xf]
                  %351 = vst [vmem:[%s323 + $0x34] sm:$0xf] %v350
                  %v352 = vld [vmem:[%s322 + $0xa8] sm:$0xf]
                  %353 = vst [vmem:[%s323 + $0x38] sm:$0xf] %v352
                  %v354 = vld [vmem:[%s322 + $0xb4] sm:$0xf]
                  %355 = vst [vmem:[%s323 + $0x3c] sm:$0xf] %v354
                $region71: #{tpu_custom_call.1} parent=58 // loop_footer
                  %s321 = sadd.s32 1, %s317
                $region72: #{tpu_custom_call.1} parent=58 // loop_footer_branch
                  %316 = sbr.rel target = $region68
                $region73: #{tpu_custom_call.1} parent=58 // loop_exit
                  _
              $region59: #{tpu_custom_call.1} parent=43 // pred_fallthru
                _
            $region44: #{tpu_custom_call.1} parent=39 // pred_fallthru
              _
            // Predicated region
            $region45: #{tpu_custom_call.1} parent=39 // pred_check
              _
            $region46: #{tpu_custom_call.1} parent=39 // pred_check_branch
              %263 = sbr.rel (0) target = $region48
            $region47: #{tpu_custom_call.1} parent=39 // pred_region
              loop: start=0, step=1, limit=1
              $region49: #{tpu_custom_call.1} parent=47 // loop_pre_header
                _
              $region50: #{tpu_custom_call.1} parent=47 // loop_header
                %s266 = sphi 0, %s270
                %p267 = scmp.ge.s32.totalorder %s266, 1
                %s271 = sphi %s257, %s257
                %s272 = sphi %s252, %s252
              $region51: #{tpu_custom_call.1} parent=47 // loop_header_branch
                %269 = sbr.rel (%p267) target = $region55
              $region52: #{tpu_custom_call.1} parent=47 // loop_body
                %v273 = vld [vmem:[%s271] sm:$0xf]
                %274 = vst [vmem:[%s272] sm:$0xf] %v273
                %v275 = vld [vmem:[%s271 + $0xc] sm:$0xf]
                %276 = vst [vmem:[%s272 + $0x4] sm:$0xf] %v275
                %v277 = vld [vmem:[%s271 + $0x18] sm:$0xf]
                %278 = vst [vmem:[%s272 + $0x8] sm:$0xf] %v277
                %v279 = vld [vmem:[%s271 + $0x24] sm:$0xf]
                %280 = vst [vmem:[%s272 + $0xc] sm:$0xf] %v279
                %v281 = vld [vmem:[%s271 + $0x30] sm:$0xf]
                %282 = vst [vmem:[%s272 + $0x10] sm:$0xf] %v281
                %v283 = vld [vmem:[%s271 + $0x3c] sm:$0xf]
                %284 = vst [vmem:[%s272 + $0x14] sm:$0xf] %v283
                %v285 = vld [vmem:[%s271 + $0x48] sm:$0xf]
                %286 = vst [vmem:[%s272 + $0x18] sm:$0xf] %v285
                %v287 = vld [vmem:[%s271 + $0x54] sm:$0xf]
                %288 = vst [vmem:[%s272 + $0x1c] sm:$0xf] %v287
                %v289 = vld [vmem:[%s271 + $0x60] sm:$0xf]
                %290 = vst [vmem:[%s272 + $0x20] sm:$0xf] %v289
                %v291 = vld [vmem:[%s271 + $0x6c] sm:$0xf]
                %292 = vst [vmem:[%s272 + $0x24] sm:$0xf] %v291
                %v293 = vld [vmem:[%s271 + $0x78] sm:$0xf]
                %294 = vst [vmem:[%s272 + $0x28] sm:$0xf] %v293
                %v295 = vld [vmem:[%s271 + $0x84] sm:$0xf]
                %296 = vst [vmem:[%s272 + $0x2c] sm:$0xf] %v295
                %v297 = vld [vmem:[%s271 + $0x90] sm:$0xf]
                %298 = vst [vmem:[%s272 + $0x30] sm:$0xf] %v297
                %v299 = vld [vmem:[%s271 + $0x9c] sm:$0xf]
                %300 = vst [vmem:[%s272 + $0x34] sm:$0xf] %v299
                %v301 = vld [vmem:[%s271 + $0xa8] sm:$0xf]
                %302 = vst [vmem:[%s272 + $0x38] sm:$0xf] %v301
                %v303 = vld [vmem:[%s271 + $0xb4] sm:$0xf]
                %304 = vst [vmem:[%s272 + $0x3c] sm:$0xf] %v303
              $region53: #{tpu_custom_call.1} parent=47 // loop_footer
                %s270 = sadd.s32 1, %s266
              $region54: #{tpu_custom_call.1} parent=47 // loop_footer_branch
                %265 = sbr.rel target = $region50
              $region55: #{tpu_custom_call.1} parent=47 // loop_exit
                _
            $region48: #{tpu_custom_call.1} parent=39 // pred_fallthru
              _
          $region40: #{tpu_custom_call.1} parent=35 // pred_fallthru
            _
          %356 = vnop
        $region36: #{tpu_custom_call.1} parent=31 // pred_fallthru
          _
        // Predicated region
        $region74: #{tpu_custom_call.1} parent=31 // pred_check
          %p357 = pneg %p73
        $region75: #{tpu_custom_call.1} parent=31 // pred_check_branch
          %359 = sbr.rel (%p357) target = $region77
        $region76: #{tpu_custom_call.1} parent=31 // pred_region
          %s360 = smul.u32 16, %s21
          %p361 = scmp.lt.s32.totalorder %s360, 47
          %s362 = scalar_select %p361, %s360, 47
          %s363 = smul.addr %s362, 8
          %s364 = scalar_lea.vmem %s1, %s363
          %s365 = smul.u32 16, %s21
        $region77: #{tpu_custom_call.1} parent=31 // pred_fallthru
          _
        // Predicated region
        $region78: #{tpu_custom_call.1} parent=31 // pred_check
          %p366 = pneg %p99
        $region79: #{tpu_custom_call.1} parent=31 // pred_check_branch
          %368 = sbr.rel (%p366) target = $region81
        $region80: #{tpu_custom_call.1} parent=31 // pred_region
          %s369 = smul.u32 16, %s20
          %p370 = scmp.lt.s32.totalorder %s369, 47
          %s371 = scalar_select %p370, %s369, 47
          %s372 = smul.addr %s371, 8
          %s373 = scalar_lea.vmem %s2, %s372
          %s374 = smul.u32 16, %s20
        $region81: #{tpu_custom_call.1} parent=31 // pred_fallthru
          _
      $region32: #{tpu_custom_call.1} parent=5 // pred_fallthru
        _
      %p375 = scmp.le.s32.totalorder 1, %s13
      %p376 = scmp.lt.s32.totalorder %s13, 10
      %p377 = pnand %p375, %p376
      %p378 = pneg %p377
      // Predicated region
      $region82: #{tpu_custom_call.1} parent=5 // pred_check
        _
      $region83: #{tpu_custom_call.1} parent=5 // pred_check_branch
        %380 = sbr.rel (%p377) target = $region85
      $region84: #{tpu_custom_call.1} parent=5 // pred_region
        %s381 = ssub.s32 %s13, 1
        %s382 = sand.u32 %s40, 1
        %s383 = sand.u32 %s40, 1
        %s384 = smul.addr %s383, 64
        %s385 = scalar_lea.vmem [#allocation3], %s384
        // Predicated region
        $region86: #{tpu_custom_call.1} parent=84 // pred_check
          %p386 = pneg %p53
        $region87: #{tpu_custom_call.1} parent=84 // pred_check_branch
          %388 = sbr.rel (%p386) target = $region89
        $region88: #{tpu_custom_call.1} parent=84 // pred_region
          _
        $region89: #{tpu_custom_call.1} parent=84 // pred_fallthru
          _
        %s389 = sand.u32 %s40, 1
        %s390 = sand.u32 %s40, 1
        %s391 = smul.addr %s390, 64
        %s392 = scalar_lea.vmem [#allocation3], %s391
        %p393 = pneg %p53
        %p394 = pneg %p50
        %s395 = smul.u32 16, %s23
        %p396 = scmp.lt.s32.totalorder %s395, 47
        %s397 = scalar_select %p396, %s395, 47
        %s398 = smul.addr %s397, 8
        %s399 = scalar_lea.vmem %s1, %s398
        %p400 = pneg %p79
        %p401 = pneg %p76
        %s402 = smul.u32 16, %s22
        %p403 = scmp.lt.s32.totalorder %s402, 47
        %s404 = scalar_select %p403, %s402, 47
        %s405 = smul.addr %s404, 8
        %s406 = scalar_lea.vmem %s2, %s405
        %p407 = pneg %p105
        %p408 = pneg %p102
        %p409 = pneg %p126
        %p410 = pneg %p123
        %p411 = pneg %p147
        %p412 = pneg %p144
        %p413 = pneg %p168
        %p414 = pneg %p165
        %p415 = pneg %p189
        %p416 = pneg %p186
        %p417 = pneg %p215
        %p418 = pneg %p212
        %s419 = smul.u32 16, %s22
        %p420 = scmp.lt.s32.totalorder %s419, 47
        %s421 = scalar_select %p420, %s419, 47
        %s422 = smul.addr %s421, 8
        %s423 = scalar_lea.vmem %s7, %s422
        %s424 = smul.u32 16, %s22
        %s425 = smul.u32 16, %s23
        %p426 = scmp.lt.s32.totalorder %s425, 47
        %s427 = scalar_select %p426, %s425, 47
        %s428 = smul.addr %s427, 8
        %s429 = scalar_lea.vmem %s1, %s428
        %s430 = smul.u32 16, %s23
        %s431 = smul.u32 16, %s22
        %p432 = scmp.lt.s32.totalorder %s431, 47
        %s433 = scalar_select %p432, %s431, 47
        %s434 = smul.addr %s433, 8
        %s435 = scalar_lea.vmem %s2, %s434
        %s436 = smul.u32 16, %s22
        %s437 = smul.u32 16, %s22
        %p438 = scmp.lt.s32.totalorder %s437, 47
        %s439 = scalar_select %p438, %s437, 47
        %s440 = smul.addr %s439, 8
        %s441 = scalar_lea.vmem %s7, %s440
        %s442 = smul.u32 16, %s22
        %p444 = scmp.eq.s32.totalorder %s23, 0
        // Predicated region
        $region90: #{tpu_custom_call.1} parent=84 // pred_check
          %p445 = pneg %p444
        $region91: #{tpu_custom_call.1} parent=84 // pred_check_branch
          %447 = sbr.rel (%p445) target = $region93
        $region92: #{tpu_custom_call.1} parent=84 // pred_region
          %vm448 = vcmask 261120
          %449 = vst.msk [vmem:[#allocation2] sm:$0xff] %vm448, 0.0
          %450 = vst.msk [vmem:[#allocation2 + $0x8] sm:$0xff] %vm448, 0.0
          %451 = vst.msk [vmem:[#allocation2 + $0x10] sm:$0xff] %vm448, 0.0
          %452 = vst.msk [vmem:[#allocation2 + $0x18] sm:$0xff] %vm448, 0.0
          %453 = vst.msk [vmem:[#allocation2 + $0x20] sm:$0xff] %vm448, 0.0
          %454 = vst.msk [vmem:[#allocation2 + $0x28] sm:$0xff] %vm448, 0.0
          %455 = vst.msk [vmem:[#allocation2 + $0x30] sm:$0xff] %vm448, 0.0
          %456 = vst.msk [vmem:[#allocation2 + $0x38] sm:$0xff] %vm448, 0.0
          %457 = vst.msk [vmem:[#allocation2 + $0x40] sm:$0xff] %vm448, 0.0
          %458 = vst.msk [vmem:[#allocation2 + $0x48] sm:$0xff] %vm448, 0.0
          %459 = vst.msk [vmem:[#allocation2 + $0x50] sm:$0xff] %vm448, 0.0
          %460 = vst.msk [vmem:[#allocation2 + $0x58] sm:$0xff] %vm448, 0.0
          %461 = vst.msk [vmem:[#allocation2 + $0x60] sm:$0xff] %vm448, 0.0
          %462 = vst.msk [vmem:[#allocation2 + $0x68] sm:$0xff] %vm448, 0.0
          %463 = vst.msk [vmem:[#allocation2 + $0x70] sm:$0xff] %vm448, 0.0
          %464 = vst.msk [vmem:[#allocation2 + $0x78] sm:$0xff] %vm448, 0.0
        $region93: #{tpu_custom_call.1} parent=84 // pred_fallthru
          _
        %v465 = vld [vmem:[#allocation2] sm:$0xff]
        %v466 = vld [vmem:[#allocation2 + $0x8] sm:$0xff]
        %v467 = vld [vmem:[#allocation2 + $0x10] sm:$0xff]
        %v468 = vld [vmem:[#allocation2 + $0x18] sm:$0xff]
        %v469 = vld [vmem:[#allocation2 + $0x20] sm:$0xff]
        %v470 = vld [vmem:[#allocation2 + $0x28] sm:$0xff]
        %v471 = vld [vmem:[#allocation2 + $0x30] sm:$0xff]
        %v472 = vld [vmem:[#allocation2 + $0x38] sm:$0xff]
        %v473 = vld [vmem:[#allocation2 + $0x40] sm:$0xff]
        %v474 = vld [vmem:[#allocation2 + $0x48] sm:$0xff]
        %v475 = vld [vmem:[#allocation2 + $0x50] sm:$0xff]
        %v476 = vld [vmem:[#allocation2 + $0x58] sm:$0xff]
        %v477 = vld [vmem:[#allocation2 + $0x60] sm:$0xff]
        %v478 = vld [vmem:[#allocation2 + $0x68] sm:$0xff]
        %v479 = vld [vmem:[#allocation2 + $0x70] sm:$0xff]
        %v480 = vld [vmem:[#allocation2 + $0x78] sm:$0xff]
        %v481 = vld [vmem:[%s385] sm:$0xf]
        %v482 = vld [vmem:[%s385 + $0x4] sm:$0xf]
        %v483 = vld [vmem:[%s385 + $0x8] sm:$0xf]
        %v484 = vld [vmem:[%s385 + $0xc] sm:$0xf]
        %v485 = vld [vmem:[%s385 + $0x10] sm:$0xf]
        %v486 = vld [vmem:[%s385 + $0x14] sm:$0xf]
        %v487 = vld [vmem:[%s385 + $0x18] sm:$0xf]
        %v488 = vld [vmem:[%s385 + $0x1c] sm:$0xf]
        %v489 = vld [vmem:[%s385 + $0x20] sm:$0xf]
        %v490 = vld [vmem:[%s385 + $0x24] sm:$0xf]
        %v491 = vld [vmem:[%s385 + $0x28] sm:$0xf]
        %v492 = vld [vmem:[%s385 + $0x2c] sm:$0xf]
        %v493 = vld [vmem:[%s385 + $0x30] sm:$0xf]
        %v494 = vld [vmem:[%s385 + $0x34] sm:$0xf]
        %v495 = vld [vmem:[%s385 + $0x38] sm:$0xf]
        %v496 = vld [vmem:[%s385 + $0x3c] sm:$0xf]
        %v497 = vld [vmem:[%s429] sm:$0xff]
        %v498 = vld [vmem:[%s429 + $0x8] sm:$0xff]
        %v499 = vld [vmem:[%s429 + $0x10] sm:$0xff]
        %v500 = vld [vmem:[%s429 + $0x18] sm:$0xff]
        %v501 = vld [vmem:[%s429 + $0x20] sm:$0xff]
        %v502 = vld [vmem:[%s429 + $0x28] sm:$0xff]
        %v503 = vld [vmem:[%s429 + $0x30] sm:$0xff]
        %v504 = vld [vmem:[%s429 + $0x38] sm:$0xff]
        %v505 = vld [vmem:[%s429 + $0x40] sm:$0xff]
        %v506 = vld [vmem:[%s429 + $0x48] sm:$0xff]
        %v507 = vld [vmem:[%s429 + $0x50] sm:$0xff]
        %v508 = vld [vmem:[%s429 + $0x58] sm:$0xff]
        %v509 = vld [vmem:[%s429 + $0x60] sm:$0xff]
        %v510 = vld [vmem:[%s429 + $0x68] sm:$0xff]
        %v511 = vld [vmem:[%s429 + $0x70] sm:$0xff]
        %v512 = vld [vmem:[%s429 + $0x78] sm:$0xff]
        %v513 = vpack.c.bf16 %v498, %v497
        %v514 = vpack.c.bf16 %v500, %v499
        %v515 = vpack.c.bf16 %v502, %v501
        %v516 = vpack.c.bf16 %v504, %v503
        %v517 = vpack.c.bf16 %v506, %v505
        %v518 = vpack.c.bf16 %v508, %v507
        %v519 = vpack.c.bf16 %v510, %v509
        %v520 = vpack.c.bf16 %v512, %v511
        %v537 = vunpack.c.l.b16 %v481
        %v538 = vunpack.c.l.b16 %v482
        %v539 = vunpack.c.l.b16 %v483
        %v540 = vunpack.c.l.b16 %v484
        %v541 = vunpack.c.l.b16 %v485
        %v542 = vunpack.c.l.b16 %v486
        %v543 = vunpack.c.l.b16 %v487
        %v544 = vunpack.c.l.b16 %v488
        %v545 = vunpack.c.l.b16 %v489
        %v546 = vunpack.c.l.b16 %v490
        %v547 = vunpack.c.l.b16 %v491
        %v548 = vunpack.c.l.b16 %v492
        %v549 = vunpack.c.l.b16 %v493
        %v550 = vunpack.c.l.b16 %v494
        %v551 = vunpack.c.l.b16 %v495
        %v552 = vunpack.c.l.b16 %v496
        %v553 = vpack.c.b16 %v538, %v537
        %v554 = vpack.c.b16 %v540, %v539
        %v555 = vpack.c.b16 %v542, %v541
        %v556 = vpack.c.b16 %v544, %v543
        %v557 = vpack.c.b16 %v546, %v545
        %v558 = vpack.c.b16 %v548, %v547
        %v559 = vpack.c.b16 %v550, %v549
        %v560 = vpack.c.b16 %v552, %v551
        %569 = vmatprep.subr.bf16.mxu0 0
        %570 = vmatpush1.bf16.msra.mxu0 %v513
        %571 = vmatprep.subr.bf16.mxu0 0
        %572 = vmatpush1.bf16.msra.mxu0 %v514
        %573 = vmatprep.subr.bf16.mxu0 0
        %574 = vmatpush1.bf16.msra.mxu0 %v515
        %575 = vmatprep.subr.bf16.mxu0 0
        %576 = vmatpush1.bf16.msra.mxu0 %v516
        %577 = vmatprep.subr.bf16.mxu0 0
        %578 = vmatpush1.bf16.msra.mxu0 %v517
        %579 = vmatprep.subr.bf16.mxu0 0
        %580 = vmatpush1.bf16.msra.mxu0 %v518
        %581 = vmatprep.subr.bf16.mxu0 0
        %582 = vmatpush1.bf16.msra.mxu0 %v519
        %583 = vmatprep.subr.bf16.mxu0 0
        %584 = vmatpush1.bf16.msra.mxu0 %v520
        %585 = vmatprep.subr.bf16.mxu0 0
        %586 = vmatpush1.bf16.msra.mxu0 0
        %587 = vmatprep.subr.bf16.mxu0 0
        %588 = vmatpush1.bf16.msra.mxu0 0
        %589 = vmatprep.subr.bf16.mxu0 0
        %590 = vmatpush1.bf16.msra.mxu0 0
        %591 = vmatprep.subr.bf16.mxu0 0
        %592 = vmatpush1.bf16.msra.mxu0 0
        %593 = vmatprep.subr.bf16.mxu0 0
        %594 = vmatpush1.bf16.msra.mxu0 0
        %595 = vmatprep.subr.bf16.mxu0 0
        %596 = vmatpush1.bf16.msra.mxu0 0
        %597 = vmatprep.subr.bf16.mxu0 0
        %598 = vmatpush1.bf16.msra.mxu0 0
        %599 = vmatprep.subr.bf16.mxu0 0
        %600 = vmatpush1.bf16.msra.mxu0 0
        %601 = vmatprep.mubr.bf16.mxu0 0
        %602 = vmatmul.mubr.bf16.gmra.mrb[0].mxu0 %v553
        %v603 = vpop.f32.mrb[0].mxu0
        %v604 = vadd.f32 0.0, %v603
        %v605 = vpop.f32.mrb[0].mxu0
        %v606 = vpop.f32.mrb[0].mxu0
        %v607 = vadd.f32 0.0, %v606
        %v608 = vpop.f32.mrb[0].mxu0
        %609 = vmatprep.mubr.bf16.mxu0 0
        %610 = vmatmul.mubr.bf16.gmra.mrb[0].mxu0 %v554
        %v611 = vpop.f32.mrb[0].mxu0
        %v612 = vadd.f32 0.0, %v611
        %v613 = vpop.f32.mrb[0].mxu0
        %v614 = vpop.f32.mrb[0].mxu0
        %v615 = vadd.f32 0.0, %v614
        %v616 = vpop.f32.mrb[0].mxu0
        %617 = vmatprep.mubr.bf16.mxu0 0
        %618 = vmatmul.mubr.bf16.gmra.mrb[0].mxu0 %v555
        %v619 = vpop.f32.mrb[0].mxu0
        %v620 = vadd.f32 0.0, %v619
        %v621 = vpop.f32.mrb[0].mxu0
        %v622 = vpop.f32.mrb[0].mxu0
        %v623 = vadd.f32 0.0, %v622
        %v624 = vpop.f32.mrb[0].mxu0
        %625 = vmatprep.mubr.bf16.mxu0 0
        %626 = vmatmul.mubr.bf16.gmra.mrb[0].mxu0 %v556
        %v627 = vpop.f32.mrb[0].mxu0
        %v628 = vadd.f32 0.0, %v627
        %v629 = vpop.f32.mrb[0].mxu0
        %v630 = vpop.f32.mrb[0].mxu0
        %v631 = vadd.f32 0.0, %v630
        %v632 = vpop.f32.mrb[0].mxu0
        %633 = vmatprep.mubr.bf16.mxu0 0
        %634 = vmatmul.mubr.bf16.gmra.mrb[0].mxu0 %v557
        %v635 = vpop.f32.mrb[0].mxu0
        %v636 = vadd.f32 0.0, %v635
        %v637 = vpop.f32.mrb[0].mxu0
        %v638 = vpop.f32.mrb[0].mxu0
        %v639 = vadd.f32 0.0, %v638
        %v640 = vpop.f32.mrb[0].mxu0
        %641 = vmatprep.mubr.bf16.mxu0 0
        %642 = vmatmul.mubr.bf16.gmra.mrb[0].mxu0 %v558
        %v643 = vpop.f32.mrb[0].mxu0
        %v644 = vadd.f32 0.0, %v643
        %v645 = vpop.f32.mrb[0].mxu0
        %v646 = vpop.f32.mrb[0].mxu0
        %v647 = vadd.f32 0.0, %v646
        %v648 = vpop.f32.mrb[0].mxu0
        %649 = vmatprep.mubr.bf16.mxu0 0
        %650 = vmatmul.mubr.bf16.gmra.mrb[0].mxu0 %v559
        %v651 = vpop.f32.mrb[0].mxu0
        %v652 = vadd.f32 0.0, %v651
        %v653 = vpop.f32.mrb[0].mxu0
        %v654 = vpop.f32.mrb[0].mxu0
        %v655 = vadd.f32 0.0, %v654
        %v656 = vpop.f32.mrb[0].mxu0
        %657 = vmatprep.mubr.bf16.mxu0 0
        %658 = vmatmul.mubr.bf16.gmra.mrb[0].mxu0 %v560
        %v659 = vpop.f32.mrb[0].mxu0
        %v660 = vadd.f32 0.0, %v659
        %v661 = vpop.f32.mrb[0].mxu0
        %v662 = vpop.f32.mrb[0].mxu0
        %v663 = vadd.f32 0.0, %v662
        %v664 = vpop.f32.mrb[0].mxu0
        %665 = vdwg.mxu0
        %v666 = vadd.f32 %v465, %v604
        %v667 = vadd.f32 %v466, %v607
        %v668 = vadd.f32 %v467, %v612
        %v669 = vadd.f32 %v468, %v615
        %v670 = vadd.f32 %v469, %v620
        %v671 = vadd.f32 %v470, %v623
        %v672 = vadd.f32 %v471, %v628
        %v673 = vadd.f32 %v472, %v631
        %v674 = vadd.f32 %v473, %v636
        %v675 = vadd.f32 %v474, %v639
        %v676 = vadd.f32 %v475, %v644
        %v677 = vadd.f32 %v476, %v647
        %v678 = vadd.f32 %v477, %v652
        %v679 = vadd.f32 %v478, %v655
        %v680 = vadd.f32 %v479, %v660
        %v681 = vadd.f32 %v480, %v663
        %vm682 = vcmask 261120
        %683 = vst.msk [vmem:[#allocation2] sm:$0xff] %vm682, %v666
        %684 = vst.msk [vmem:[#allocation2 + $0x8] sm:$0xff] %vm682, %v667
        %685 = vst.msk [vmem:[#allocation2 + $0x10] sm:$0xff] %vm682, %v668
        %686 = vst.msk [vmem:[#allocation2 + $0x18] sm:$0xff] %vm682, %v669
        %687 = vst.msk [vmem:[#allocation2 + $0x20] sm:$0xff] %vm682, %v670
        %688 = vst.msk [vmem:[#allocation2 + $0x28] sm:$0xff] %vm682, %v671
        %689 = vst.msk [vmem:[#allocation2 + $0x30] sm:$0xff] %vm682, %v672
        %690 = vst.msk [vmem:[#allocation2 + $0x38] sm:$0xff] %vm682, %v673
        %691 = vst.msk [vmem:[#allocation2 + $0x40] sm:$0xff] %vm682, %v674
        %692 = vst.msk [vmem:[#allocation2 + $0x48] sm:$0xff] %vm682, %v675
        %693 = vst.msk [vmem:[#allocation2 + $0x50] sm:$0xff] %vm682, %v676
        %694 = vst.msk [vmem:[#allocation2 + $0x58] sm:$0xff] %vm682, %v677
        %695 = vst.msk [vmem:[#allocation2 + $0x60] sm:$0xff] %vm682, %v678
        %696 = vst.msk [vmem:[#allocation2 + $0x68] sm:$0xff] %vm682, %v679
        %697 = vst.msk [vmem:[#allocation2 + $0x70] sm:$0xff] %vm682, %v680
        %698 = vst.msk [vmem:[#allocation2 + $0x78] sm:$0xff] %vm682, %v681
        %p699 = scmp.eq.s32.totalorder %s23, 2
        // Predicated region
        $region94: #{tpu_custom_call.1} parent=84 // pred_check
          %p700 = pneg %p699
        $region95: #{tpu_custom_call.1} parent=84 // pred_check_branch
          %702 = sbr.rel (%p700) target = $region97
        $region96: #{tpu_custom_call.1} parent=84 // pred_region
          %v703 = vld [vmem:[%s435] sm:$0xff]
          %v704 = vld [vmem:[%s435 + $0x8] sm:$0xff]
          %v705 = vld [vmem:[%s435 + $0x10] sm:$0xff]
          %v706 = vld [vmem:[%s435 + $0x18] sm:$0xff]
          %v707 = vld [vmem:[%s435 + $0x20] sm:$0xff]
          %v708 = vld [vmem:[%s435 + $0x28] sm:$0xff]
          %v709 = vld [vmem:[%s435 + $0x30] sm:$0xff]
          %v710 = vld [vmem:[%s435 + $0x38] sm:$0xff]
          %v711 = vld [vmem:[%s435 + $0x40] sm:$0xff]
          %v712 = vld [vmem:[%s435 + $0x48] sm:$0xff]
          %v713 = vld [vmem:[%s435 + $0x50] sm:$0xff]
          %v714 = vld [vmem:[%s435 + $0x58] sm:$0xff]
          %v715 = vld [vmem:[%s435 + $0x60] sm:$0xff]
          %v716 = vld [vmem:[%s435 + $0x68] sm:$0xff]
          %v717 = vld [vmem:[%s435 + $0x70] sm:$0xff]
          %v718 = vld [vmem:[%s435 + $0x78] sm:$0xff]
          %v719 = vld [vmem:[#allocation2] sm:$0xff]
          %v720 = vld [vmem:[#allocation2 + $0x8] sm:$0xff]
          %v721 = vld [vmem:[#allocation2 + $0x10] sm:$0xff]
          %v722 = vld [vmem:[#allocation2 + $0x18] sm:$0xff]
          %v723 = vld [vmem:[#allocation2 + $0x20] sm:$0xff]
          %v724 = vld [vmem:[#allocation2 + $0x28] sm:$0xff]
          %v725 = vld [vmem:[#allocation2 + $0x30] sm:$0xff]
          %v726 = vld [vmem:[#allocation2 + $0x38] sm:$0xff]
          %v727 = vld [vmem:[#allocation2 + $0x40] sm:$0xff]
          %v728 = vld [vmem:[#allocation2 + $0x48] sm:$0xff]
          %v729 = vld [vmem:[#allocation2 + $0x50] sm:$0xff]
          %v730 = vld [vmem:[#allocation2 + $0x58] sm:$0xff]
          %v731 = vld [vmem:[#allocation2 + $0x60] sm:$0xff]
          %v732 = vld [vmem:[#allocation2 + $0x68] sm:$0xff]
          %v733 = vld [vmem:[#allocation2 + $0x70] sm:$0xff]
          %v734 = vld [vmem:[#allocation2 + $0x78] sm:$0xff]
          %v735 = vadd.f32 %v703, %v719
          %v736 = vadd.f32 %v704, %v720
          %v737 = vadd.f32 %v705, %v721
          %v738 = vadd.f32 %v706, %v722
          %v739 = vadd.f32 %v707, %v723
          %v740 = vadd.f32 %v708, %v724
          %v741 = vadd.f32 %v709, %v725
          %v742 = vadd.f32 %v710, %v726
          %v743 = vadd.f32 %v711, %v727
          %v744 = vadd.f32 %v712, %v728
          %v745 = vadd.f32 %v713, %v729
          %v746 = vadd.f32 %v714, %v730
          %v747 = vadd.f32 %v715, %v731
          %v748 = vadd.f32 %v716, %v732
          %v749 = vadd.f32 %v717, %v733
          %v750 = vadd.f32 %v718, %v734
          %v751 = vld [vmem:[%s3] sm:$0xff]
          %v752 = vld [vmem:[%s3 + $0x8] sm:$0xff]
          %v753 = vld [vmem:[%s3 + $0x10] sm:$0xff]
          %v754 = vld [vmem:[%s3 + $0x18] sm:$0xff]
          %v755 = vld [vmem:[%s4] sm:$0x1]
          %v757 = vlaneseq
          %v758 = vshrl.u32 %v757, 7
          %v759 = vsub.s32 0, %v758
          %v760 = vrot.slane %v755, %v759
          %v763 = vsel %vm682, %v735, 0
          %v766 = vsel %vm682, %v736, 0
          %v769 = vsel %vm682, %v737, 0
          %v772 = vsel %vm682, %v738, 0
          %v775 = vsel %vm682, %v739, 0
          %v778 = vsel %vm682, %v740, 0
          %v781 = vsel %vm682, %v741, 0
          %v784 = vsel %vm682, %v742, 0
          %v787 = vsel %vm682, %v743, 0
          %v790 = vsel %vm682, %v744, 0
          %v793 = vsel %vm682, %v745, 0
          %v796 = vsel %vm682, %v746, 0
          %v799 = vsel %vm682, %v747, 0
          %v802 = vsel %vm682, %v748, 0
          %v805 = vsel %vm682, %v749, 0
          %v808 = vsel %vm682, %v750, 0
          %810 = vmatprep.subr.mxu0 0.0
          %811 = vmatpush1.msra.mxu0 %v751
          %812 = vmatprep.subr.mxu0 0.0
          %813 = vmatpush1.msra.mxu0 %v752
          %814 = vmatprep.subr.mxu0 0.0
          %815 = vmatpush1.msra.mxu0 %v753
          %816 = vmatprep.subr.mxu0 0.0
          %817 = vmatpush1.msra.mxu0 %v754
          %818 = vmatprep.subr.mxu0 0.0
          %819 = vmatpush1.msra.mxu0 0.0
          %820 = vmatprep.subr.mxu0 0.0
          %821 = vmatpush1.msra.mxu0 0.0
          %822 = vmatprep.subr.mxu0 0.0
          %823 = vmatpush1.msra.mxu0 0.0
          %824 = vmatprep.subr.mxu0 0.0
          %825 = vmatpush1.msra.mxu0 0.0
          %826 = vmatprep.subr.mxu0 0.0
          %827 = vmatpush1.msra.mxu0 0.0
          %828 = vmatprep.subr.mxu0 0.0
          %829 = vmatpush1.msra.mxu0 0.0
          %830 = vmatprep.subr.mxu0 0.0
          %831 = vmatpush1.msra.mxu0 0.0
          %832 = vmatprep.subr.mxu0 0.0
          %833 = vmatpush1.msra.mxu0 0.0
          %834 = vmatprep.subr.mxu0 0.0
          %835 = vmatpush1.msra.mxu0 0.0
          %836 = vmatprep.subr.mxu0 0.0
          %837 = vmatpush1.msra.mxu0 0.0
          %838 = vmatprep.subr.mxu0 0.0
          %839 = vmatpush1.msra.mxu0 0.0
          %840 = vmatprep.subr.mxu0 0.0
          %841 = vmatpush1.msra.mxu0 0.0
          %842 = vmatprep.subr.mxu0 0.0
          %843 = vmatpush1.msra.mxu0 0.0
          %844 = vmatprep.subr.mxu0 0.0
          %845 = vmatpush1.msra.mxu0 0.0
          %846 = vmatprep.subr.mxu0 0.0
          %847 = vmatpush1.msra.mxu0 0.0
          %848 = vmatprep.subr.mxu0 0.0
          %849 = vmatpush1.msra.mxu0 0.0
          %850 = vmatprep.subr.mxu0 0.0
          %851 = vmatpush1.msra.mxu0 0.0
          %852 = vmatprep.subr.mxu0 0.0
          %853 = vmatpush1.msra.mxu0 0.0
          %854 = vmatprep.subr.mxu0 0.0
          %855 = vmatpush1.msra.mxu0 0.0
          %856 = vmatprep.subr.mxu0 0.0
          %857 = vmatpush1.msra.mxu0 0.0
          %858 = vmatprep.subr.mxu0 0.0
          %859 = vmatpush1.msra.mxu0 0.0
          %860 = vmatprep.subr.mxu0 0.0
          %861 = vmatpush1.msra.mxu0 0.0
          %862 = vmatprep.subr.mxu0 0.0
          %863 = vmatpush1.msra.mxu0 0.0
          %864 = vmatprep.subr.mxu0 0.0
          %865 = vmatpush1.msra.mxu0 0.0
          %866 = vmatprep.subr.mxu0 0.0
          %867 = vmatpush1.msra.mxu0 0.0
          %868 = vmatprep.subr.mxu0 0.0
          %869 = vmatpush1.msra.mxu0 0.0
          %870 = vmatprep.subr.mxu0 0.0
          %871 = vmatpush1.msra.mxu0 0.0
          %872 = vmatprep.subr.mxu0 0.0
          %873 = vmatpush1.msra.mxu0 0.0
          %874 = vmatprep.mubr.f32.mxu0 0.0
          %875 = vmatmul.mubr.f32.gmra.mrb[0].mxu0 %v763
          %v876 = vpop.f32.mrb[0].mxu0
          %v877 = vadd.f32 %v760, %v876
          %v878 = vpop.f32.mrb[0].mxu0
          %879 = vmatprep.mubr.f32.mxu0 0.0
          %880 = vmatmul.mubr.f32.gmra.mrb[0].mxu0 %v766
          %v881 = vpop.f32.mrb[0].mxu0
          %v882 = vadd.f32 %v760, %v881
          %v883 = vpop.f32.mrb[0].mxu0
          %884 = vmatprep.mubr.f32.mxu0 0.0
          %885 = vmatmul.mubr.f32.gmra.mrb[0].mxu0 %v769
          %v886 = vpop.f32.mrb[0].mxu0
          %v887 = vadd.f32 %v760, %v886
          %v888 = vpop.f32.mrb[0].mxu0
          %889 = vmatprep.mubr.f32.mxu0 0.0
          %890 = vmatmul.mubr.f32.gmra.mrb[0].mxu0 %v772
          %v891 = vpop.f32.mrb[0].mxu0
          %v892 = vadd.f32 %v760, %v891
          %v893 = vpop.f32.mrb[0].mxu0
          %894 = vmatprep.mubr.f32.mxu0 0.0
          %895 = vmatmul.mubr.f32.gmra.mrb[0].mxu0 %v775
          %v896 = vpop.f32.mrb[0].mxu0
          %v897 = vadd.f32 %v760, %v896
          %v898 = vpop.f32.mrb[0].mxu0
          %899 = vmatprep.mubr.f32.mxu0 0.0
          %900 = vmatmul.mubr.f32.gmra.mrb[0].mxu0 %v778
          %v901 = vpop.f32.mrb[0].mxu0
          %v902 = vadd.f32 %v760, %v901
          %v903 = vpop.f32.mrb[0].mxu0
          %904 = vmatprep.mubr.f32.mxu0 0.0
          %905 = vmatmul.mubr.f32.gmra.mrb[0].mxu0 %v781
          %v906 = vpop.f32.mrb[0].mxu0
          %v907 = vadd.f32 %v760, %v906
          %v908 = vpop.f32.mrb[0].mxu0
          %909 = vmatprep.mubr.f32.mxu0 0.0
          %910 = vmatmul.mubr.f32.gmra.mrb[0].mxu0 %v784
          %v911 = vpop.f32.mrb[0].mxu0
          %v912 = vadd.f32 %v760, %v911
          %v913 = vpop.f32.mrb[0].mxu0
          %914 = vmatprep.mubr.f32.mxu0 0.0
          %915 = vmatmul.mubr.f32.gmra.mrb[0].mxu0 %v787
          %v916 = vpop.f32.mrb[0].mxu0
          %v917 = vadd.f32 %v760, %v916
          %v918 = vpop.f32.mrb[0].mxu0
          %919 = vmatprep.mubr.f32.mxu0 0.0
          %920 = vmatmul.mubr.f32.gmra.mrb[0].mxu0 %v790
          %v921 = vpop.f32.mrb[0].mxu0
          %v922 = vadd.f32 %v760, %v921
          %v923 = vpop.f32.mrb[0].mxu0
          %924 = vmatprep.mubr.f32.mxu0 0.0
          %925 = vmatmul.mubr.f32.gmra.mrb[0].mxu0 %v793
          %v926 = vpop.f32.mrb[0].mxu0
          %v927 = vadd.f32 %v760, %v926
          %v928 = vpop.f32.mrb[0].mxu0
          %929 = vmatprep.mubr.f32.mxu0 0.0
          %930 = vmatmul.mubr.f32.gmra.mrb[0].mxu0 %v796
          %v931 = vpop.f32.mrb[0].mxu0
          %v932 = vadd.f32 %v760, %v931
          %v933 = vpop.f32.mrb[0].mxu0
          %934 = vmatprep.mubr.f32.mxu0 0.0
          %935 = vmatmul.mubr.f32.gmra.mrb[0].mxu0 %v799
          %v936 = vpop.f32.mrb[0].mxu0
          %v937 = vadd.f32 %v760, %v936
          %v938 = vpop.f32.mrb[0].mxu0
          %939 = vmatprep.mubr.f32.mxu0 0.0
          %940 = vmatmul.mubr.f32.gmra.mrb[0].mxu0 %v802
          %v941 = vpop.f32.mrb[0].mxu0
          %v942 = vadd.f32 %v760, %v941
          %v943 = vpop.f32.mrb[0].mxu0
          %944 = vmatprep.mubr.f32.mxu0 0.0
          %945 = vmatmul.mubr.f32.gmra.mrb[0].mxu0 %v805
          %v946 = vpop.f32.mrb[0].mxu0
          %v947 = vadd.f32 %v760, %v946
          %v948 = vpop.f32.mrb[0].mxu0
          %949 = vmatprep.mubr.f32.mxu0 0.0
          %950 = vmatmul.mubr.f32.gmra.mrb[0].mxu0 %v808
          %v951 = vpop.f32.mrb[0].mxu0
          %v952 = vadd.f32 %v760, %v951
          %v953 = vpop.f32.mrb[0].mxu0
          %954 = vdwg.mxu0
          %vm955 = vcmp.gt.f32.partialorder %v877, 0.0
          %vm956 = vcmp.gt.f32.partialorder %v882, 0.0
          %vm957 = vcmp.gt.f32.partialorder %v887, 0.0
          %vm958 = vcmp.gt.f32.partialorder %v892, 0.0
          %vm959 = vcmp.gt.f32.partialorder %v897, 0.0
          %vm960 = vcmp.gt.f32.partialorder %v902, 0.0
          %vm961 = vcmp.gt.f32.partialorder %v907, 0.0
          %vm962 = vcmp.gt.f32.partialorder %v912, 0.0
          %vm963 = vcmp.gt.f32.partialorder %v917, 0.0
          %vm964 = vcmp.gt.f32.partialorder %v922, 0.0
          %vm965 = vcmp.gt.f32.partialorder %v927, 0.0
          %vm966 = vcmp.gt.f32.partialorder %v932, 0.0
          %vm967 = vcmp.gt.f32.partialorder %v937, 0.0
          %vm968 = vcmp.gt.f32.partialorder %v942, 0.0
          %vm969 = vcmp.gt.f32.partialorder %v947, 0.0
          %vm970 = vcmp.gt.f32.partialorder %v952, 0.0
          %v971 = vmul.f32 %v877, 0.01
          %v972 = vmul.f32 %v882, 0.01
          %v973 = vmul.f32 %v887, 0.01
          %v974 = vmul.f32 %v892, 0.01
          %v975 = vmul.f32 %v897, 0.01
          %v976 = vmul.f32 %v902, 0.01
          %v977 = vmul.f32 %v907, 0.01
          %v978 = vmul.f32 %v912, 0.01
          %v979 = vmul.f32 %v917, 0.01
          %v980 = vmul.f32 %v922, 0.01
          %v981 = vmul.f32 %v927, 0.01
          %v982 = vmul.f32 %v932, 0.01
          %v983 = vmul.f32 %v937, 0.01
          %v984 = vmul.f32 %v942, 0.01
          %v985 = vmul.f32 %v947, 0.01
          %v986 = vmul.f32 %v952, 0.01
          %v987 = vsel %vm955, %v877, %v971
          %v988 = vsel %vm956, %v882, %v972
          %v989 = vsel %vm957, %v887, %v973
          %v990 = vsel %vm958, %v892, %v974
          %v991 = vsel %vm959, %v897, %v975
          %v992 = vsel %vm960, %v902, %v976
          %v993 = vsel %vm961, %v907, %v977
          %v994 = vsel %vm962, %v912, %v978
          %v995 = vsel %vm963, %v917, %v979
          %v996 = vsel %vm964, %v922, %v980
          %v997 = vsel %vm965, %v927, %v981
          %v998 = vsel %vm966, %v932, %v982
          %v999 = vsel %vm967, %v937, %v983
          %v1000 = vsel %vm968, %v942, %v984
          %v1001 = vsel %vm969, %v947, %v985
          %v1002 = vsel %vm970, %v952, %v986
          %v1003 = vld [vmem:[%s5] sm:$0xff]
          %v1004 = vld [vmem:[%s5 + $0x8] sm:$0xff]
          %v1005 = vld [vmem:[%s5 + $0x10] sm:$0xff]
          %v1006 = vld [vmem:[%s5 + $0x18] sm:$0xff]
          %v1007 = vld [vmem:[%s6] sm:$0x1]
          %v1009 = vlaneseq
          %v1010 = vshrl.u32 %v1009, 7
          %v1011 = vsub.s32 0, %v1010
          %v1012 = vrot.slane %v1007, %v1011
          %v1015 = vsel %vm682, %v987, 0
          %v1018 = vsel %vm682, %v988, 0
          %v1021 = vsel %vm682, %v989, 0
          %v1024 = vsel %vm682, %v990, 0
          %v1027 = vsel %vm682, %v991, 0
          %v1030 = vsel %vm682, %v992, 0
          %v1033 = vsel %vm682, %v993, 0
          %v1036 = vsel %vm682, %v994, 0
          %v1039 = vsel %vm682, %v995, 0
          %v1042 = vsel %vm682, %v996, 0
          %v1045 = vsel %vm682, %v997, 0
          %v1048 = vsel %vm682, %v998, 0
          %v1051 = vsel %vm682, %v999, 0
          %v1054 = vsel %vm682, %v1000, 0
          %v1057 = vsel %vm682, %v1001, 0
          %v1060 = vsel %vm682, %v1002, 0
          %1062 = vmatprep.subr.mxu0 0.0
          %1063 = vmatpush1.msra.mxu0 %v1003
          %1064 = vmatprep.subr.mxu0 0.0
          %1065 = vmatpush1.msra.mxu0 %v1004
          %1066 = vmatprep.subr.mxu0 0.0
          %1067 = vmatpush1.msra.mxu0 %v1005
          %1068 = vmatprep.subr.mxu0 0.0
          %1069 = vmatpush1.msra.mxu0 %v1006
          %1070 = vmatprep.subr.mxu0 0.0
          %1071 = vmatpush1.msra.mxu0 0.0
          %1072 = vmatprep.subr.mxu0 0.0
          %1073 = vmatpush1.msra.mxu0 0.0
          %1074 = vmatprep.subr.mxu0 0.0
          %1075 = vmatpush1.msra.mxu0 0.0
          %1076 = vmatprep.subr.mxu0 0.0
          %1077 = vmatpush1.msra.mxu0 0.0
          %1078 = vmatprep.subr.mxu0 0.0
          %1079 = vmatpush1.msra.mxu0 0.0
          %1080 = vmatprep.subr.mxu0 0.0
          %1081 = vmatpush1.msra.mxu0 0.0
          %1082 = vmatprep.subr.mxu0 0.0
          %1083 = vmatpush1.msra.mxu0 0.0
          %1084 = vmatprep.subr.mxu0 0.0
          %1085 = vmatpush1.msra.mxu0 0.0
          %1086 = vmatprep.subr.mxu0 0.0
          %1087 = vmatpush1.msra.mxu0 0.0
          %1088 = vmatprep.subr.mxu0 0.0
          %1089 = vmatpush1.msra.mxu0 0.0
          %1090 = vmatprep.subr.mxu0 0.0
          %1091 = vmatpush1.msra.mxu0 0.0
          %1092 = vmatprep.subr.mxu0 0.0
          %1093 = vmatpush1.msra.mxu0 0.0
          %1094 = vmatprep.subr.mxu0 0.0
          %1095 = vmatpush1.msra.mxu0 0.0
          %1096 = vmatprep.subr.mxu0 0.0
          %1097 = vmatpush1.msra.mxu0 0.0
          %1098 = vmatprep.subr.mxu0 0.0
          %1099 = vmatpush1.msra.mxu0 0.0
          %1100 = vmatprep.subr.mxu0 0.0
          %1101 = vmatpush1.msra.mxu0 0.0
          %1102 = vmatprep.subr.mxu0 0.0
          %1103 = vmatpush1.msra.mxu0 0.0
          %1104 = vmatprep.subr.mxu0 0.0
          %1105 = vmatpush1.msra.mxu0 0.0
          %1106 = vmatprep.subr.mxu0 0.0
          %1107 = vmatpush1.msra.mxu0 0.0
          %1108 = vmatprep.subr.mxu0 0.0
          %1109 = vmatpush1.msra.mxu0 0.0
          %1110 = vmatprep.subr.mxu0 0.0
          %1111 = vmatpush1.msra.mxu0 0.0
          %1112 = vmatprep.subr.mxu0 0.0
          %1113 = vmatpush1.msra.mxu0 0.0
          %1114 = vmatprep.subr.mxu0 0.0
          %1115 = vmatpush1.msra.mxu0 0.0
          %1116 = vmatprep.subr.mxu0 0.0
          %1117 = vmatpush1.msra.mxu0 0.0
          %1118 = vmatprep.subr.mxu0 0.0
          %1119 = vmatpush1.msra.mxu0 0.0
          %1120 = vmatprep.subr.mxu0 0.0
          %1121 = vmatpush1.msra.mxu0 0.0
          %1122 = vmatprep.subr.mxu0 0.0
          %1123 = vmatpush1.msra.mxu0 0.0
          %1124 = vmatprep.subr.mxu0 0.0
          %1125 = vmatpush1.msra.mxu0 0.0
          %1126 = vmatprep.mubr.f32.mxu0 0.0
          %1127 = vmatmul.mubr.f32.gmra.mrb[0].mxu0 %v1015
          %v1128 = vpop.f32.mrb[0].mxu0
          %v1129 = vadd.f32 %v1012, %v1128
          %v1130 = vpop.f32.mrb[0].mxu0
          %1131 = vmatprep.mubr.f32.mxu0 0.0
          %1132 = vmatmul.mubr.f32.gmra.mrb[0].mxu0 %v1018
          %v1133 = vpop.f32.mrb[0].mxu0
          %v1134 = vadd.f32 %v1012, %v1133
          %v1135 = vpop.f32.mrb[0].mxu0
          %1136 = vmatprep.mubr.f32.mxu0 0.0
          %1137 = vmatmul.mubr.f32.gmra.mrb[0].mxu0 %v1021
          %v1138 = vpop.f32.mrb[0].mxu0
          %v1139 = vadd.f32 %v1012, %v1138
          %v1140 = vpop.f32.mrb[0].mxu0
          %1141 = vmatprep.mubr.f32.mxu0 0.0
          %1142 = vmatmul.mubr.f32.gmra.mrb[0].mxu0 %v1024
          %v1143 = vpop.f32.mrb[0].mxu0
          %v1144 = vadd.f32 %v1012, %v1143
          %v1145 = vpop.f32.mrb[0].mxu0
          %1146 = vmatprep.mubr.f32.mxu0 0.0
          %1147 = vmatmul.mubr.f32.gmra.mrb[0].mxu0 %v1027
          %v1148 = vpop.f32.mrb[0].mxu0
          %v1149 = vadd.f32 %v1012, %v1148
          %v1150 = vpop.f32.mrb[0].mxu0
          %1151 = vmatprep.mubr.f32.mxu0 0.0
          %1152 = vmatmul.mubr.f32.gmra.mrb[0].mxu0 %v1030
          %v1153 = vpop.f32.mrb[0].mxu0
          %v1154 = vadd.f32 %v1012, %v1153
          %v1155 = vpop.f32.mrb[0].mxu0
          %1156 = vmatprep.mubr.f32.mxu0 0.0
          %1157 = vmatmul.mubr.f32.gmra.mrb[0].mxu0 %v1033
          %v1158 = vpop.f32.mrb[0].mxu0
          %v1159 = vadd.f32 %v1012, %v1158
          %v1160 = vpop.f32.mrb[0].mxu0
          %1161 = vmatprep.mubr.f32.mxu0 0.0
          %1162 = vmatmul.mubr.f32.gmra.mrb[0].mxu0 %v1036
          %v1163 = vpop.f32.mrb[0].mxu0
          %v1164 = vadd.f32 %v1012, %v1163
          %v1165 = vpop.f32.mrb[0].mxu0
          %1166 = vmatprep.mubr.f32.mxu0 0.0
          %1167 = vmatmul.mubr.f32.gmra.mrb[0].mxu0 %v1039
          %v1168 = vpop.f32.mrb[0].mxu0
          %v1169 = vadd.f32 %v1012, %v1168
          %v1170 = vpop.f32.mrb[0].mxu0
          %1171 = vmatprep.mubr.f32.mxu0 0.0
          %1172 = vmatmul.mubr.f32.gmra.mrb[0].mxu0 %v1042
          %v1173 = vpop.f32.mrb[0].mxu0
          %v1174 = vadd.f32 %v1012, %v1173
          %v1175 = vpop.f32.mrb[0].mxu0
          %1176 = vmatprep.mubr.f32.mxu0 0.0
          %1177 = vmatmul.mubr.f32.gmra.mrb[0].mxu0 %v1045
          %v1178 = vpop.f32.mrb[0].mxu0
          %v1179 = vadd.f32 %v1012, %v1178
          %v1180 = vpop.f32.mrb[0].mxu0
          %1181 = vmatprep.mubr.f32.mxu0 0.0
          %1182 = vmatmul.mubr.f32.gmra.mrb[0].mxu0 %v1048
          %v1183 = vpop.f32.mrb[0].mxu0
          %v1184 = vadd.f32 %v1012, %v1183
          %v1185 = vpop.f32.mrb[0].mxu0
          %1186 = vmatprep.mubr.f32.mxu0 0.0
          %1187 = vmatmul.mubr.f32.gmra.mrb[0].mxu0 %v1051
          %v1188 = vpop.f32.mrb[0].mxu0
          %v1189 = vadd.f32 %v1012, %v1188
          %v1190 = vpop.f32.mrb[0].mxu0
          %1191 = vmatprep.mubr.f32.mxu0 0.0
          %1192 = vmatmul.mubr.f32.gmra.mrb[0].mxu0 %v1054
          %v1193 = vpop.f32.mrb[0].mxu0
          %v1194 = vadd.f32 %v1012, %v1193
          %v1195 = vpop.f32.mrb[0].mxu0
          %1196 = vmatprep.mubr.f32.mxu0 0.0
          %1197 = vmatmul.mubr.f32.gmra.mrb[0].mxu0 %v1057
          %v1198 = vpop.f32.mrb[0].mxu0
          %v1199 = vadd.f32 %v1012, %v1198
          %v1200 = vpop.f32.mrb[0].mxu0
          %1201 = vmatprep.mubr.f32.mxu0 0.0
          %1202 = vmatmul.mubr.f32.gmra.mrb[0].mxu0 %v1060
          %v1203 = vpop.f32.mrb[0].mxu0
          %v1204 = vadd.f32 %v1012, %v1203
          %v1205 = vpop.f32.mrb[0].mxu0
          %1206 = vdwg.mxu0
          %vm1207 = vcmask 31744
          %v1208 = vsel %vm1207, %v1129, -inf
          %1209 = vmax.xlane.f32.xlu0 %v1208
          %v1210 = vpop.xlane.xlu0 %1209
          %v1211 = vsel %vm1207, %v1134, -inf
          %1212 = vmax.xlane.f32.xlu0 %v1211
          %v1213 = vpop.xlane.xlu0 %1212
          %v1214 = vsel %vm1207, %v1139, -inf
          %1215 = vmax.xlane.f32.xlu0 %v1214
          %v1216 = vpop.xlane.xlu0 %1215
          %v1217 = vsel %vm1207, %v1144, -inf
          %1218 = vmax.xlane.f32.xlu0 %v1217
          %v1219 = vpop.xlane.xlu0 %1218
          %v1220 = vsel %vm1207, %v1149, -inf
          %1221 = vmax.xlane.f32.xlu0 %v1220
          %v1222 = vpop.xlane.xlu0 %1221
          %v1223 = vsel %vm1207, %v1154, -inf
          %1224 = vmax.xlane.f32.xlu0 %v1223
          %v1225 = vpop.xlane.xlu0 %1224
          %v1226 = vsel %vm1207, %v1159, -inf
          %1227 = vmax.xlane.f32.xlu0 %v1226
          %v1228 = vpop.xlane.xlu0 %1227
          %v1229 = vsel %vm1207, %v1164, -inf
          %1230 = vmax.xlane.f32.xlu0 %v1229
          %v1231 = vpop.xlane.xlu0 %1230
          %v1232 = vsel %vm1207, %v1169, -inf
          %1233 = vmax.xlane.f32.xlu0 %v1232
          %v1234 = vpop.xlane.xlu0 %1233
          %v1235 = vsel %vm1207, %v1174, -inf
          %1236 = vmax.xlane.f32.xlu0 %v1235
          %v1237 = vpop.xlane.xlu0 %1236
          %v1238 = vsel %vm1207, %v1179, -inf
          %1239 = vmax.xlane.f32.xlu0 %v1238
          %v1240 = vpop.xlane.xlu0 %1239
          %v1241 = vsel %vm1207, %v1184, -inf
          %1242 = vmax.xlane.f32.xlu0 %v1241
          %v1243 = vpop.xlane.xlu0 %1242
          %v1244 = vsel %vm1207, %v1189, -inf
          %1245 = vmax.xlane.f32.xlu0 %v1244
          %v1246 = vpop.xlane.xlu0 %1245
          %v1247 = vsel %vm1207, %v1194, -inf
          %1248 = vmax.xlane.f32.xlu0 %v1247
          %v1249 = vpop.xlane.xlu0 %1248
          %v1250 = vsel %vm1207, %v1199, -inf
          %1251 = vmax.xlane.f32.xlu0 %v1250
          %v1252 = vpop.xlane.xlu0 %1251
          %v1253 = vsel %vm1207, %v1204, -inf
          %1254 = vmax.xlane.f32.xlu0 %v1253
          %v1255 = vpop.xlane.xlu0 %1254
          %vm1256 = vcmp.eq.f32.partialorder %v1129, %v1210
          %vm1257 = vcmp.eq.f32.partialorder %v1134, %v1213
          %vm1258 = vcmp.eq.f32.partialorder %v1139, %v1216
          %vm1259 = vcmp.eq.f32.partialorder %v1144, %v1219
          %vm1260 = vcmp.eq.f32.partialorder %v1149, %v1222
          %vm1261 = vcmp.eq.f32.partialorder %v1154, %v1225
          %vm1262 = vcmp.eq.f32.partialorder %v1159, %v1228
          %vm1263 = vcmp.eq.f32.partialorder %v1164, %v1231
          %vm1264 = vcmp.eq.f32.partialorder %v1169, %v1234
          %vm1265 = vcmp.eq.f32.partialorder %v1174, %v1237
          %vm1266 = vcmp.eq.f32.partialorder %v1179, %v1240
          %vm1267 = vcmp.eq.f32.partialorder %v1184, %v1243
          %vm1268 = vcmp.eq.f32.partialorder %v1189, %v1246
          %vm1269 = vcmp.eq.f32.partialorder %v1194, %v1249
          %vm1270 = vcmp.eq.f32.partialorder %v1199, %v1252
          %vm1271 = vcmp.eq.f32.partialorder %v1204, %v1255
          %v1272 = vsel %vm1256, 1, 0
          %v1273 = vsel %vm1257, 1, 0
          %v1274 = vsel %vm1258, 1, 0
          %v1275 = vsel %vm1259, 1, 0
          %v1276 = vsel %vm1260, 1, 0
          %v1277 = vsel %vm1261, 1, 0
          %v1278 = vsel %vm1262, 1, 0
          %v1279 = vsel %vm1263, 1, 0
          %v1280 = vsel %vm1264, 1, 0
          %v1281 = vsel %vm1265, 1, 0
          %v1282 = vsel %vm1266, 1, 0
          %v1283 = vsel %vm1267, 1, 0
          %v1284 = vsel %vm1268, 1, 0
          %v1285 = vsel %vm1269, 1, 0
          %v1286 = vsel %vm1270, 1, 0
          %v1287 = vsel %vm1271, 1, 0
          %v1288 = vcvt.s32.f32 %v1272
          %v1289 = vcvt.s32.f32 %v1273
          %v1290 = vcvt.s32.f32 %v1274
          %v1291 = vcvt.s32.f32 %v1275
          %v1292 = vcvt.s32.f32 %v1276
          %v1293 = vcvt.s32.f32 %v1277
          %v1294 = vcvt.s32.f32 %v1278
          %v1295 = vcvt.s32.f32 %v1279
          %v1296 = vcvt.s32.f32 %v1280
          %v1297 = vcvt.s32.f32 %v1281
          %v1298 = vcvt.s32.f32 %v1282
          %v1299 = vcvt.s32.f32 %v1283
          %v1300 = vcvt.s32.f32 %v1284
          %v1301 = vcvt.s32.f32 %v1285
          %v1302 = vcvt.s32.f32 %v1286
          %v1303 = vcvt.s32.f32 %v1287
          %1304 = vst.msk [vmem:[%s441] sm:$0xff] %vm1207, %v1288
          %1305 = vst.msk [vmem:[%s441 + $0x8] sm:$0xff] %vm1207, %v1289
          %1306 = vst.msk [vmem:[%s441 + $0x10] sm:$0xff] %vm1207, %v1290
          %1307 = vst.msk [vmem:[%s441 + $0x18] sm:$0xff] %vm1207, %v1291
          %1308 = vst.msk [vmem:[%s441 + $0x20] sm:$0xff] %vm1207, %v1292
          %1309 = vst.msk [vmem:[%s441 + $0x28] sm:$0xff] %vm1207, %v1293
          %1310 = vst.msk [vmem:[%s441 + $0x30] sm:$0xff] %vm1207, %v1294
          %1311 = vst.msk [vmem:[%s441 + $0x38] sm:$0xff] %vm1207, %v1295
          %1312 = vst.msk [vmem:[%s441 + $0x40] sm:$0xff] %vm1207, %v1296
          %1313 = vst.msk [vmem:[%s441 + $0x48] sm:$0xff] %vm1207, %v1297
          %1314 = vst.msk [vmem:[%s441 + $0x50] sm:$0xff] %vm1207, %v1298
          %1315 = vst.msk [vmem:[%s441 + $0x58] sm:$0xff] %vm1207, %v1299
          %1316 = vst.msk [vmem:[%s441 + $0x60] sm:$0xff] %vm1207, %v1300
          %1317 = vst.msk [vmem:[%s441 + $0x68] sm:$0xff] %vm1207, %v1301
          %1318 = vst.msk [vmem:[%s441 + $0x70] sm:$0xff] %vm1207, %v1302
          %1319 = vst.msk [vmem:[%s441 + $0x78] sm:$0xff] %vm1207, %v1303
        $region97: #{tpu_custom_call.1} parent=84 // pred_fallthru
          _
        %s1320 = smul.u32 16, %s22
        %p1321 = scmp.lt.s32.totalorder %s1320, 47
        %s1322 = scalar_select %p1321, %s1320, 47
        %s1323 = smul.addr %s1322, 8
        %s1324 = scalar_lea.vmem %s7, %s1323
        // Predicated region
        $region98: #{tpu_custom_call.1} parent=84 // pred_check
          %p1325 = pneg %p212
        $region99: #{tpu_custom_call.1} parent=84 // pred_check_branch
          %1327 = sbr.rel (%p1325) target = $region101
        $region100: #{tpu_custom_call.1} parent=84 // pred_region
          %s1328 = smul.u32 16, %s22
        $region101: #{tpu_custom_call.1} parent=84 // pred_fallthru
          _
      $region85: #{tpu_custom_call.1} parent=5 // pred_fallthru
        _
      %p1329 = scmp.le.s32.totalorder 2, %s13
      // Predicated region
      $region102: #{tpu_custom_call.1} parent=5 // pred_check
        %p1330 = pneg %p1329
      $region103: #{tpu_custom_call.1} parent=5 // pred_check_branch
        %1332 = sbr.rel (%p1330) target = $region105
      $region104: #{tpu_custom_call.1} parent=5 // pred_region
        %s1333 = ssub.s32 %s13, 2
        // Predicated region
        $region106: #{tpu_custom_call.1} parent=104 // pred_check
          %p1334 = pneg %p218
        $region107: #{tpu_custom_call.1} parent=104 // pred_check_branch
          %1336 = sbr.rel (%p1334) target = $region109
        $region108: #{tpu_custom_call.1} parent=104 // pred_region
          %s1337 = smul.u32 16, %s24
          %p1338 = scmp.lt.s32.totalorder %s1337, 47
          %s1339 = scalar_select %p1338, %s1337, 47
          %s1340 = smul.addr %s1339, 8
          %s1341 = scalar_lea.vmem %s7, %s1340
        $region109: #{tpu_custom_call.1} parent=104 // pred_fallthru
          _
      $region105: #{tpu_custom_call.1} parent=5 // pred_fallthru
        _
    $region6: #{tpu_custom_call.1} parent=1 // loop_footer
      %s17 = sadd.s32 1, %s13
    $region7: #{tpu_custom_call.1} parent=1 // loop_footer_branch
      %12 = sbr.rel target = $region3
    $region8: #{tpu_custom_call.1} parent=1 // loop_exit
      _

</llo_original>
